<compile_context>
chip_gen: v7x
topology: tpu7x:2x2x1
jax: 0.10.0
libtpu: 0.0.40
codegen_flags: <defaults>
</compile_context>

<pallas_src>
import math
import jax
import jax.numpy as jnp
from jax.experimental import pallas as pl
from jax.experimental.pallas import tpu as pltpu


class Config:
    N_MEL_CHANNELS = 16
    EMOTION_EMBED_DIM = 8


PAD = 8   # per-batch zero rows on each side of the time axis (>= conv half-width 2,
          # a sublane multiple so writebacks are 8-row aligned)


def _make_kernel(B, T, NM, C1, C2, E):
    Sp = T + 2 * PAD        # padded segment length per batch
    R = B * Sp              # rows of the flat (time-major, batch-concatenated) buffers
    NC = R - 2 * PAD        # "core" rows for which conv outputs are computed
    K3 = 3
    H2, H3 = 2, 1           # conv2 / conv3 half-widths

    def kernel(xcat_ref, mask_ref,
               w1_ref, b1_ref, w2p_ref, w2l_ref, b2_ref, w3_ref, b3_ref,
               wfc_ref, bfc_ref,
               out_ref,
               h1_sc, h2_sc):
        mask = mask_ref[...]                         # (NC, 1): 1.0 real frames, 0.0 pad rows

        # Zero only the OUTER guard rows; interior pad rows are re-zeroed by the
        # mask multiply after each layer.
        h1_sc[0:PAD, :] = jnp.zeros((PAD, C1), h1_sc.dtype)
        h1_sc[PAD + NC:R, :] = jnp.zeros((PAD, C1), h1_sc.dtype)
        h2_sc[0:PAD, :] = jnp.zeros((PAD, C2), h2_sc.dtype)
        h2_sc[PAD + NC:R, :] = jnp.zeros((PAD, C2), h2_sc.dtype)

        # ---- conv1 as ONE im2col matmul (K = 5 * N_MEL), NO ReLU ----
        acc = jnp.dot(xcat_ref[...], w1_ref[...],
                      preferred_element_type=jnp.float32)        # (NC, C1)
        h1_sc[PAD:PAD + NC, :] = ((acc + b1_ref[...]) * mask).astype(h1_sc.dtype)

        # ---- conv2 + ReLU: taps paired along the contraction dim (2 + 2 + 1) ----
        acc = jnp.zeros((NC, C2), jnp.float32)
        for p in range(2):
            s0 = PAD - H2 + 2 * p
            a = jnp.concatenate([h1_sc[s0:s0 + NC, :],
                                 h1_sc[s0 + 1:s0 + 1 + NC, :]], axis=1)   # (NC, 2*C1)
            acc += jnp.dot(a, w2p_ref[p], preferred_element_type=jnp.float32)
        s4 = PAD - H2 + 4
        acc += jnp.dot(h1_sc[s4:s4 + NC, :], w2l_ref[...],
                       preferred_element_type=jnp.float32)
        h2_sc[PAD:PAD + NC, :] = (jnp.maximum(acc + b2_ref[...], 0.0) * mask
                                  ).astype(h2_sc.dtype)

        # ---- conv3 + ReLU (K = C2 per tap; slice the scratch directly) ----
        acc = jnp.zeros((NC, C2), jnp.float32)
        for k in range(K3):
            s = PAD - H3 + k
            acc += jnp.dot(h2_sc[s:s + NC, :], w3_ref[k],
                           preferred_element_type=jnp.float32)
        # Write masked h3 back into h2_sc (all conv3 reads are done).  Pad rows stay
        # zero, which cannot win the max because h3 is post-ReLU (>= 0).
        h2_sc[PAD:PAD + NC, :] = (jnp.maximum(acc + b3_ref[...], 0.0) * mask
                                  ).astype(h2_sc.dtype)

        # ---- batched AdaptiveMaxPool1d(1) over time + Linear ----
        v = h2_sc[...].reshape(B, Sp, C2)            # Sp is a sublane multiple
        pooled = jnp.max(v, axis=1)                  # (B, C2)
        emb = jnp.dot(pooled, wfc_ref[...], preferred_element_type=jnp.float32)
        out_ref[...] = (emb + bfc_ref[...]).astype(out_ref.dtype)

    return kernel


def big_emotion_encoder_forward(params, mel):
    """mel: (B, N_MEL_CHANNELS, T) -> (B, EMOTION_EMBED_DIM)."""
    B, NM, T = mel.shape
    C2, C1, _ = params["conv2_w"].shape
    E = params["fc_w"].shape[0]
    Sp = T + 2 * PAD
    R = B * Sp
    NC = R - 2 * PAD
    cdt = jnp.bfloat16

    # Flat, time-major layout with per-batch zero padding (conv halo + batch isolation).
    x = jnp.transpose(mel.astype(jnp.float32), (0, 2, 1))       # (B, T, NM)
    x = jnp.pad(x, ((0, 0), (PAD, PAD), (0, 0)))                # (B, Sp, NM)
    x_flat = x.reshape(R, NM)

    # im2col for conv1: 5 time-shifted slices concatenated along channels (K = 5*NM).
    xcat = jnp.concatenate(
        [x_flat[PAD - 2 + k:PAD - 2 + k + NC, :] for k in range(5)], axis=1
    ).astype(cdt)                                                # (NC, 5*NM)

    pos = (jnp.arange(NC) + PAD) % Sp
    mask = ((pos >= PAD) & (pos < PAD + T)).astype(jnp.float32)[:, None]   # (NC, 1)

    # Weights as (Cin, Cout)-style matrices, cast to bf16 (halves weight DMA).
    w1 = jnp.transpose(params["conv1_w"][:, 0], (2, 1, 0)).reshape(5 * NM, C1).astype(cdt)
    w2t = jnp.transpose(params["conv2_w"], (2, 1, 0))            # (5, C1, C2)
    w2_pairs = jnp.stack([jnp.concatenate([w2t[0], w2t[1]], axis=0),
                          jnp.concatenate([w2t[2], w2t[3]], axis=0)]).astype(cdt)  # (2, 2*C1, C2)
    w2_last = w2t[4].astype(cdt)                                 # (C1, C2)
    w3 = jnp.transpose(params["conv3_w"], (2, 1, 0)).astype(cdt) # (3, C2, C2)
    wfc = jnp.transpose(params["fc_w"]).astype(cdt)              # (C2, E)
    b1 = params["conv1_b"].reshape(1, C1).astype(jnp.float32)
    b2 = params["conv2_b"].reshape(1, C2).astype(jnp.float32)
    b3 = params["conv3_b"].reshape(1, C2).astype(jnp.float32)
    bfc = params["fc_b"].reshape(1, E).astype(jnp.float32)

    kernel = _make_kernel(B, T, NM, C1, C2, E)

    def full(shape):
        n = len(shape)
        return pl.BlockSpec(shape, lambda i, n=n: (0,) * n)

    operands = (xcat, mask, w1, b1, w2_pairs, w2_last, b2, w3, b3, wfc, bfc)

    out = pl.pallas_call(
        kernel,
        out_shape=jax.ShapeDtypeStruct((B, E), jnp.float32),
        grid=(1,),                                   # single grid step: whole net in VMEM
        in_specs=[full(op.shape) for op in operands],
        out_specs=full((B, E)),
        scratch_shapes=[pltpu.VMEM((R, C1), cdt),
                        pltpu.VMEM((R, C2), cdt)],
        compiler_params=pltpu.CompilerParams(
            dimension_semantics=("arbitrary",)),
    )(*operands)
    return out


def reference_forward(params, mel):
    """Pure-JAX f32 reference mirroring the PyTorch forward."""
    B, NM, T = mel.shape
    hp = jax.lax.Precision.HIGHEST

    def conv1d(x, w, b, pad):
        # x: (B, Cin, T), w: (Cout, Cin, K)
        K = w.shape[-1]
        xp = jnp.pad(x, ((0, 0), (0, 0), (pad, pad)))
        out = jnp.zeros((B, w.shape[0], T), jnp.float32)
        for k in range(K):
            out = out + jnp.einsum("bct,oc->bot", xp[:, :, k:k + T], w[:, :, k],
                                   precision=hp)
        return out + b[None, :, None]

    # conv2d with kernel height == N_MEL and stride height == N_MEL is a 1-D conv over time
    h1 = conv1d(mel, params["conv1_w"][:, 0], params["conv1_b"], 2)
    h2 = jax.nn.relu(conv1d(h1, params["conv2_w"], params["conv2_b"], 2))
    h3 = jax.nn.relu(conv1d(h2, params["conv3_w"], params["conv3_b"], 1))
    pooled = jnp.max(h3, axis=2)                                   # AdaptiveMaxPool1d(1)
    return jnp.dot(pooled, params["fc_w"].T, precision=hp) + params["fc_b"]


def init_params(key, nm, c1, c2, e):
    ks = jax.random.split(key, 8)

    def u(k, shape, fan_in):
        bound = 1.0 / math.sqrt(fan_in)
        return jax.random.uniform(k, shape, jnp.float32, -bound, bound)

    return dict(
        conv1_w=u(ks[0], (c1, 1, nm, 5), 1 * nm * 5),
        conv1_b=u(ks[1], (c1,), 1 * nm * 5),
        conv2_w=u(ks[2], (c2, c1, 5), c1 * 5),
        conv2_b=u(ks[3], (c2,), c1 * 5),
        conv3_w=u(ks[4], (c2, c2, 3), c2 * 3),
        conv3_b=u(ks[5], (c2,), c2 * 3),
        fc_w=u(ks[6], (e, c2), c2),
        fc_b=u(ks[7], (e,), c2),
    )


if __name__ == "__main__":
    B = 2
    NM = Config.N_MEL_CHANNELS        # 16
    E = Config.EMOTION_EMBED_DIM      # 8
    C1, C2 = 128, 256
    T = 32

    key = jax.random.PRNGKey(0)
    kp, kx = jax.random.split(key)
    params = init_params(kp, NM, C1, C2, E)
    mel = jax.random.normal(kx, (B, NM, T), jnp.float32)

    out = big_emotion_encoder_forward(params, mel)
    out = jax.block_until_ready(out)

    ref = reference_forward(params, mel)
    assert out.shape == (B, E)
    err = jnp.max(jnp.abs(out - ref))
    # bf16 weights/activations with f32 accumulation -> loosened tolerance vs f32 reference
    assert jnp.allclose(out, ref, rtol=5e-2, atol=5e-2), f"mismatch vs reference: {err}"

    print("KERNEL_OK")
</pallas_src>

<mosaic_0001>
module attributes {stable_mosaic.version = 11 : i64} {
  func.func @kernel(%arg0: i32, %arg1: memref<80x80xbf16, #tpu.memory_space<vmem>>, %arg2: memref<80x1xf32, #tpu.memory_space<vmem>>, %arg3: memref<80x128xbf16, #tpu.memory_space<vmem>>, %arg4: memref<1x128xf32, #tpu.memory_space<vmem>>, %arg5: memref<2x256x256xbf16, #tpu.memory_space<vmem>>, %arg6: memref<128x256xbf16, #tpu.memory_space<vmem>>, %arg7: memref<1x256xf32, #tpu.memory_space<vmem>>, %arg8: memref<3x256x256xbf16, #tpu.memory_space<vmem>>, %arg9: memref<1x256xf32, #tpu.memory_space<vmem>>, %arg10: memref<256x8xbf16, #tpu.memory_space<vmem>>, %arg11: memref<1x8xf32, #tpu.memory_space<vmem>>, %arg12: memref<2x8xf32, #tpu.memory_space<vmem>>, %arg13: memref<96x128xbf16, #tpu.memory_space<vmem>>, %arg14: memref<96x256xbf16, #tpu.memory_space<vmem>>) attributes {dimension_semantics = [#tpu.dimension_semantics<arbitrary>], iteration_bounds = array<i64: 1>, scalar_prefetch = 0 : i64, scratch_operands = 2 : i64, tpu.core_type = #tpu.core_type<tc>, window_params = [{pipeline_mode = #tpu.pipeline_mode<synchronous>, transform_indices = @transform_0, window_bounds = array<i64: 80, 80>}, {pipeline_mode = #tpu.pipeline_mode<synchronous>, transform_indices = @transform_1, window_bounds = array<i64: 80, 1>}, {pipeline_mode = #tpu.pipeline_mode<synchronous>, transform_indices = @transform_2, window_bounds = array<i64: 80, 128>}, {pipeline_mode = #tpu.pipeline_mode<synchronous>, transform_indices = @transform_3, window_bounds = array<i64: 1, 128>}, {pipeline_mode = #tpu.pipeline_mode<synchronous>, transform_indices = @transform_4, window_bounds = array<i64: 2, 256, 256>}, {pipeline_mode = #tpu.pipeline_mode<synchronous>, transform_indices = @transform_5, window_bounds = array<i64: 128, 256>}, {pipeline_mode = #tpu.pipeline_mode<synchronous>, transform_indices = @transform_6, window_bounds = array<i64: 1, 256>}, {pipeline_mode = #tpu.pipeline_mode<synchronous>, transform_indices = @transform_7, window_bounds = array<i64: 3, 256, 256>}, {pipeline_mode = #tpu.pipeline_mode<synchronous>, transform_indices = @transform_8, window_bounds = array<i64: 1, 256>}, {pipeline_mode = #tpu.pipeline_mode<synchronous>, transform_indices = @transform_9, window_bounds = array<i64: 256, 8>}, {pipeline_mode = #tpu.pipeline_mode<synchronous>, transform_indices = @transform_10, window_bounds = array<i64: 1, 8>}, {pipeline_mode = #tpu.pipeline_mode<synchronous>, transform_indices = @transform_11, window_bounds = array<i64: 2, 8>}]} {
    %c0 = arith.constant 0 : index
    %c0_0 = arith.constant 0 : index
    %0 = vector.load %arg2[%c0, %c0_0] : memref<80x1xf32, #tpu.memory_space<vmem>>, vector<80x1xf32>
    %cst = arith.constant 0.000000e+00 : bf16
    %1 = vector.broadcast %cst : bf16 to vector<8x128xbf16>
    %c0_1 = arith.constant 0 : index
    %c0_2 = arith.constant 0 : index
    %2 = vector.load %arg13[%c0_1, %c0_2] : memref<96x128xbf16, #tpu.memory_space<vmem>>, vector<8x128xbf16>
    tpu.vector_store %arg13[%c0_1, %c0_2], %1 {strides = array<i32>} : memref<96x128xbf16, #tpu.memory_space<vmem>>, vector<8x128xbf16>,
    %cst_3 = arith.constant 0.000000e+00 : bf16
    %3 = vector.broadcast %cst_3 : bf16 to vector<8x128xbf16>
    %c88 = arith.constant 88 : index
    %c0_4 = arith.constant 0 : index
    %4 = vector.load %arg13[%c88, %c0_4] : memref<96x128xbf16, #tpu.memory_space<vmem>>, vector<8x128xbf16>
    tpu.vector_store %arg13[%c88, %c0_4], %3 {strides = array<i32>} : memref<96x128xbf16, #tpu.memory_space<vmem>>, vector<8x128xbf16>,
    %cst_5 = arith.constant 0.000000e+00 : bf16
    %5 = vector.broadcast %cst_5 : bf16 to vector<8x256xbf16>
    %c0_6 = arith.constant 0 : index
    %c0_7 = arith.constant 0 : index
    %6 = vector.load %arg14[%c0_6, %c0_7] : memref<96x256xbf16, #tpu.memory_space<vmem>>, vector<8x256xbf16>
    tpu.vector_store %arg14[%c0_6, %c0_7], %5 {strides = array<i32>} : memref<96x256xbf16, #tpu.memory_space<vmem>>, vector<8x256xbf16>,
    %cst_8 = arith.constant 0.000000e+00 : bf16
    %7 = vector.broadcast %cst_8 : bf16 to vector<8x256xbf16>
    %c88_9 = arith.constant 88 : index
    %c0_10 = arith.constant 0 : index
    %8 = vector.load %arg14[%c88_9, %c0_10] : memref<96x256xbf16, #tpu.memory_space<vmem>>, vector<8x256xbf16>
    tpu.vector_store %arg14[%c88_9, %c0_10], %7 {strides = array<i32>} : memref<96x256xbf16, #tpu.memory_space<vmem>>, vector<8x256xbf16>,
    %c0_11 = arith.constant 0 : index
    %c0_12 = arith.constant 0 : index
    %9 = vector.load %arg1[%c0_11, %c0_12] : memref<80x80xbf16, #tpu.memory_space<vmem>>, vector<80x80xbf16>
    %c0_13 = arith.constant 0 : index
    %c0_14 = arith.constant 0 : index
    %10 = vector.load %arg3[%c0_13, %c0_14] : memref<80x128xbf16, #tpu.memory_space<vmem>>, vector<80x128xbf16>
    %cst_15 = arith.constant dense<0.000000e+00> : vector<80x128xf32>
    %11 = tpu.matmul %9, %10, %cst_15 {dimension_numbers = #tpu.dot_dimension_numbers<[1], [0], [0], [1], [0, 0, 1, 1], [], []>} : vector<80x80xbf16>, vector<80x128xbf16>, vector<80x128xf32> -> vector<80x128xf32>
    %c0_16 = arith.constant 0 : index
    %c0_17 = arith.constant 0 : index
    %12 = vector.load %arg4[%c0_16, %c0_17] : memref<1x128xf32, #tpu.memory_space<vmem>>, vector<1x128xf32>
    %13 = vector.broadcast %12 : vector<1x128xf32> to vector<80x128xf32>
    %14 = arith.addf %11, %13 : vector<80x128xf32>
    %15 = vector.broadcast %0 : vector<80x1xf32> to vector<80x128xf32>
    %16 = arith.mulf %14, %15 : vector<80x128xf32>
    %17 = arith.truncf %16 : vector<80x128xf32> to vector<80x128xbf16>
    %c8 = arith.constant 8 : index
    %c0_18 = arith.constant 0 : index
    %18 = vector.load %arg13[%c8, %c0_18] : memref<96x128xbf16, #tpu.memory_space<vmem>>, vector<80x128xbf16>
    tpu.vector_store %arg13[%c8, %c0_18], %17 {strides = array<i32>} : memref<96x128xbf16, #tpu.memory_space<vmem>>, vector<80x128xbf16>,
    %cst_19 = arith.constant 0.000000e+00 : f32
    %19 = vector.broadcast %cst_19 : f32 to vector<80x256xf32>
    %c6 = arith.constant 6 : index
    %c0_20 = arith.constant 0 : index
    %20 = vector.load %arg13[%c6, %c0_20] : memref<96x128xbf16, #tpu.memory_space<vmem>>, vector<80x128xbf16>
    %c7 = arith.constant 7 : index
    %c0_21 = arith.constant 0 : index
    %21 = vector.load %arg13[%c7, %c0_21] : memref<96x128xbf16, #tpu.memory_space<vmem>>, vector<80x128xbf16>
    %22 = tpu.concatenate %20, %21 in 1 : vector<80x128xbf16>, vector<80x128xbf16> -> vector<80x256xbf16>
    %c0_22 = arith.constant 0 : index
    %c0_23 = arith.constant 0 : index
    %c0_24 = arith.constant 0 : index
    %23 = vector.load %arg5[%c0_22, %c0_23, %c0_24] : memref<2x256x256xbf16, #tpu.memory_space<vmem>>, vector<1x256x256xbf16>
    %24 = vector.shape_cast %23 : vector<1x256x256xbf16> to vector<256x256xbf16>
    %cst_25 = arith.constant dense<0.000000e+00> : vector<80x256xf32>
    %25 = tpu.matmul %22, %24, %cst_25 {dimension_numbers = #tpu.dot_dimension_numbers<[1], [0], [0], [1], [0, 0, 1, 1], [], []>} : vector<80x256xbf16>, vector<256x256xbf16>, vector<80x256xf32> -> vector<80x256xf32>
    %26 = arith.addf %19, %25 : vector<80x256xf32>
    %c8_26 = arith.constant 8 : index
    %c0_27 = arith.constant 0 : index
    %27 = vector.load %arg13[%c8_26, %c0_27] : memref<96x128xbf16, #tpu.memory_space<vmem>>, vector<80x128xbf16>
    %c9 = arith.constant 9 : index
    %c0_28 = arith.constant 0 : index
    %28 = vector.load %arg13[%c9, %c0_28] : memref<96x128xbf16, #tpu.memory_space<vmem>>, vector<80x128xbf16>
    %29 = tpu.concatenate %27, %28 in 1 : vector<80x128xbf16>, vector<80x128xbf16> -> vector<80x256xbf16>
    %c1 = arith.constant 1 : index
    %c0_29 = arith.constant 0 : index
    %c0_30 = arith.constant 0 : index
    %30 = vector.load %arg5[%c1, %c0_29, %c0_30] : memref<2x256x256xbf16, #tpu.memory_space<vmem>>, vector<1x256x256xbf16>
    %31 = vector.shape_cast %30 : vector<1x256x256xbf16> to vector<256x256xbf16>
    %cst_31 = arith.constant dense<0.000000e+00> : vector<80x256xf32>
    %32 = tpu.matmul %29, %31, %cst_31 {dimension_numbers = #tpu.dot_dimension_numbers<[1], [0], [0], [1], [0, 0, 1, 1], [], []>} : vector<80x256xbf16>, vector<256x256xbf16>, vector<80x256xf32> -> vector<80x256xf32>
    %33 = arith.addf %26, %32 : vector<80x256xf32>
    %c10 = arith.constant 10 : index
    %c0_32 = arith.constant 0 : index
    %34 = vector.load %arg13[%c10, %c0_32] : memref<96x128xbf16, #tpu.memory_space<vmem>>, vector<80x128xbf16>
    %c0_33 = arith.constant 0 : index
    %c0_34 = arith.constant 0 : index
    %35 = vector.load %arg6[%c0_33, %c0_34] : memref<128x256xbf16, #tpu.memory_space<vmem>>, vector<128x256xbf16>
    %cst_35 = arith.constant dense<0.000000e+00> : vector<80x256xf32>
    %36 = tpu.matmul %34, %35, %cst_35 {dimension_numbers = #tpu.dot_dimension_numbers<[1], [0], [0], [1], [0, 0, 1, 1], [], []>} : vector<80x128xbf16>, vector<128x256xbf16>, vector<80x256xf32> -> vector<80x256xf32>
    %37 = arith.addf %33, %36 : vector<80x256xf32>
    %c0_36 = arith.constant 0 : index
    %c0_37 = arith.constant 0 : index
    %38 = vector.load %arg7[%c0_36, %c0_37] : memref<1x256xf32, #tpu.memory_space<vmem>>, vector<1x256xf32>
    %39 = vector.broadcast %38 : vector<1x256xf32> to vector<80x256xf32>
    %40 = arith.addf %37, %39 : vector<80x256xf32>
    %cst_38 = arith.constant 0.000000e+00 : f32
    %41 = vector.broadcast %cst_38 : f32 to vector<80x256xf32>
    %42 = arith.maximumf %40, %41 : vector<80x256xf32>
    %43 = vector.broadcast %0 : vector<80x1xf32> to vector<80x256xf32>
    %44 = arith.mulf %42, %43 : vector<80x256xf32>
    %45 = arith.truncf %44 : vector<80x256xf32> to vector<80x256xbf16>
    %c8_39 = arith.constant 8 : index
    %c0_40 = arith.constant 0 : index
    %46 = vector.load %arg14[%c8_39, %c0_40] : memref<96x256xbf16, #tpu.memory_space<vmem>>, vector<80x256xbf16>
    tpu.vector_store %arg14[%c8_39, %c0_40], %45 {strides = array<i32>} : memref<96x256xbf16, #tpu.memory_space<vmem>>, vector<80x256xbf16>,
    %cst_41 = arith.constant 0.000000e+00 : f32
    %47 = vector.broadcast %cst_41 : f32 to vector<80x256xf32>
    %c7_42 = arith.constant 7 : index
    %c0_43 = arith.constant 0 : index
    %48 = vector.load %arg14[%c7_42, %c0_43] : memref<96x256xbf16, #tpu.memory_space<vmem>>, vector<80x256xbf16>
    %c0_44 = arith.constant 0 : index
    %c0_45 = arith.constant 0 : index
    %c0_46 = arith.constant 0 : index
    %49 = vector.load %arg8[%c0_44, %c0_45, %c0_46] : memref<3x256x256xbf16, #tpu.memory_space<vmem>>, vector<1x256x256xbf16>
    %50 = vector.shape_cast %49 : vector<1x256x256xbf16> to vector<256x256xbf16>
    %cst_47 = arith.constant dense<0.000000e+00> : vector<80x256xf32>
    %51 = tpu.matmul %48, %50, %cst_47 {dimension_numbers = #tpu.dot_dimension_numbers<[1], [0], [0], [1], [0, 0, 1, 1], [], []>} : vector<80x256xbf16>, vector<256x256xbf16>, vector<80x256xf32> -> vector<80x256xf32>
    %52 = arith.addf %47, %51 : vector<80x256xf32>
    %c8_48 = arith.constant 8 : index
    %c0_49 = arith.constant 0 : index
    %53 = vector.load %arg14[%c8_48, %c0_49] : memref<96x256xbf16, #tpu.memory_space<vmem>>, vector<80x256xbf16>
    %c1_50 = arith.constant 1 : index
    %c0_51 = arith.constant 0 : index
    %c0_52 = arith.constant 0 : index
    %54 = vector.load %arg8[%c1_50, %c0_51, %c0_52] : memref<3x256x256xbf16, #tpu.memory_space<vmem>>, vector<1x256x256xbf16>
    %55 = vector.shape_cast %54 : vector<1x256x256xbf16> to vector<256x256xbf16>
    %cst_53 = arith.constant dense<0.000000e+00> : vector<80x256xf32>
    %56 = tpu.matmul %53, %55, %cst_53 {dimension_numbers = #tpu.dot_dimension_numbers<[1], [0], [0], [1], [0, 0, 1, 1], [], []>} : vector<80x256xbf16>, vector<256x256xbf16>, vector<80x256xf32> -> vector<80x256xf32>
    %57 = arith.addf %52, %56 : vector<80x256xf32>
    %c9_54 = arith.constant 9 : index
    %c0_55 = arith.constant 0 : index
    %58 = vector.load %arg14[%c9_54, %c0_55] : memref<96x256xbf16, #tpu.memory_space<vmem>>, vector<80x256xbf16>
    %c2 = arith.constant 2 : index
    %c0_56 = arith.constant 0 : index
    %c0_57 = arith.constant 0 : index
    %59 = vector.load %arg8[%c2, %c0_56, %c0_57] : memref<3x256x256xbf16, #tpu.memory_space<vmem>>, vector<1x256x256xbf16>
    %60 = vector.shape_cast %59 : vector<1x256x256xbf16> to vector<256x256xbf16>
    %cst_58 = arith.constant dense<0.000000e+00> : vector<80x256xf32>
    %61 = tpu.matmul %58, %60, %cst_58 {dimension_numbers = #tpu.dot_dimension_numbers<[1], [0], [0], [1], [0, 0, 1, 1], [], []>} : vector<80x256xbf16>, vector<256x256xbf16>, vector<80x256xf32> -> vector<80x256xf32>
    %62 = arith.addf %57, %61 : vector<80x256xf32>
    %c0_59 = arith.constant 0 : index
    %c0_60 = arith.constant 0 : index
    %63 = vector.load %arg9[%c0_59, %c0_60] : memref<1x256xf32, #tpu.memory_space<vmem>>, vector<1x256xf32>
    %64 = vector.broadcast %63 : vector<1x256xf32> to vector<80x256xf32>
    %65 = arith.addf %62, %64 : vector<80x256xf32>
    %cst_61 = arith.constant 0.000000e+00 : f32
    %66 = vector.broadcast %cst_61 : f32 to vector<80x256xf32>
    %67 = arith.maximumf %65, %66 : vector<80x256xf32>
    %68 = vector.broadcast %0 : vector<80x1xf32> to vector<80x256xf32>
    %69 = arith.mulf %67, %68 : vector<80x256xf32>
    %70 = arith.truncf %69 : vector<80x256xf32> to vector<80x256xbf16>
    %c8_62 = arith.constant 8 : index
    %c0_63 = arith.constant 0 : index
    %71 = vector.load %arg14[%c8_62, %c0_63] : memref<96x256xbf16, #tpu.memory_space<vmem>>, vector<80x256xbf16>
    tpu.vector_store %arg14[%c8_62, %c0_63], %70 {strides = array<i32>} : memref<96x256xbf16, #tpu.memory_space<vmem>>, vector<80x256xbf16>,
    %c0_64 = arith.constant 0 : index
    %c0_65 = arith.constant 0 : index
    %72 = vector.load %arg14[%c0_64, %c0_65] : memref<96x256xbf16, #tpu.memory_space<vmem>>, vector<96x256xbf16>
    %73 = vector.shape_cast %72 : vector<96x256xbf16> to vector<2x48x256xbf16>
    %cst_66 = arith.constant dense<0xFF80> : vector<2x256xbf16>
    %74 = vector.multi_reduction <maximumf>, %73, %cst_66 [1] : vector<2x48x256xbf16> to vector<2x256xbf16>
    %c0_67 = arith.constant 0 : index
    %c0_68 = arith.constant 0 : index
    %75 = vector.load %arg10[%c0_67, %c0_68] : memref<256x8xbf16, #tpu.memory_space<vmem>>, vector<256x8xbf16>
    %cst_69 = arith.constant dense<0.000000e+00> : vector<2x8xf32>
    %76 = tpu.matmul %74, %75, %cst_69 {dimension_numbers = #tpu.dot_dimension_numbers<[1], [0], [0], [1], [0, 0, 1, 1], [], []>} : vector<2x256xbf16>, vector<256x8xbf16>, vector<2x8xf32> -> vector<2x8xf32>
    %c0_70 = arith.constant 0 : index
    %c0_71 = arith.constant 0 : index
    %77 = vector.load %arg11[%c0_70, %c0_71] : memref<1x8xf32, #tpu.memory_space<vmem>>, vector<1x8xf32>
    %78 = vector.broadcast %77 : vector<1x8xf32> to vector<2x8xf32>
    %79 = arith.addf %76, %78 : vector<2x8xf32>
    %c0_72 = arith.constant 0 : index
    %c0_73 = arith.constant 0 : index
    %80 = vector.load %arg12[%c0_72, %c0_73] : memref<2x8xf32, #tpu.memory_space<vmem>>, vector<2x8xf32>
    tpu.vector_store %arg12[%c0_72, %c0_73], %79 {strides = array<i32>} : memref<2x8xf32, #tpu.memory_space<vmem>>, vector<2x8xf32>,
    return
  }
  func.func @transform_0(%arg0: i32) -> (i32, i32) {
    %c0_i32 = arith.constant 0 : i32
    %c0_i32_0 = arith.constant 0 : i32
    %c0_i32_1 = arith.constant 0 : i32
    return %c0_i32, %c0_i32_0 : i32, i32
  }
  func.func @transform_1(%arg0: i32) -> (i32, i32) {
    %c0_i32 = arith.constant 0 : i32
    %c0_i32_0 = arith.constant 0 : i32
    %c0_i32_1 = arith.constant 0 : i32
    return %c0_i32, %c0_i32_0 : i32, i32
  }
  func.func @transform_2(%arg0: i32) -> (i32, i32) {
    %c0_i32 = arith.constant 0 : i32
    %c0_i32_0 = arith.constant 0 : i32
    %c0_i32_1 = arith.constant 0 : i32
    return %c0_i32, %c0_i32_0 : i32, i32
  }
  func.func @transform_3(%arg0: i32) -> (i32, i32) {
    %c0_i32 = arith.constant 0 : i32
    %c0_i32_0 = arith.constant 0 : i32
    %c0_i32_1 = arith.constant 0 : i32
    return %c0_i32, %c0_i32_0 : i32, i32
  }
  func.func @transform_4(%arg0: i32) -> (i32, i32, i32) {
    %c0_i32 = arith.constant 0 : i32
    %c0_i32_0 = arith.constant 0 : i32
    %c0_i32_1 = arith.constant 0 : i32
    %c0_i32_2 = arith.constant 0 : i32
    return %c0_i32, %c0_i32_0, %c0_i32_1 : i32, i32, i32
  }
  func.func @transform_5(%arg0: i32) -> (i32, i32) {
    %c0_i32 = arith.constant 0 : i32
    %c0_i32_0 = arith.constant 0 : i32
    %c0_i32_1 = arith.constant 0 : i32
    return %c0_i32, %c0_i32_0 : i32, i32
  }
  func.func @transform_6(%arg0: i32) -> (i32, i32) {
    %c0_i32 = arith.constant 0 : i32
    %c0_i32_0 = arith.constant 0 : i32
    %c0_i32_1 = arith.constant 0 : i32
    return %c0_i32, %c0_i32_0 : i32, i32
  }
  func.func @transform_7(%arg0: i32) -> (i32, i32, i32) {
    %c0_i32 = arith.constant 0 : i32
    %c0_i32_0 = arith.constant 0 : i32
    %c0_i32_1 = arith.constant 0 : i32
    %c0_i32_2 = arith.constant 0 : i32
    return %c0_i32, %c0_i32_0, %c0_i32_1 : i32, i32, i32
  }
  func.func @transform_8(%arg0: i32) -> (i32, i32) {
    %c0_i32 = arith.constant 0 : i32
    %c0_i32_0 = arith.constant 0 : i32
    %c0_i32_1 = arith.constant 0 : i32
    return %c0_i32, %c0_i32_0 : i32, i32
  }
  func.func @transform_9(%arg0: i32) -> (i32, i32) {
    %c0_i32 = arith.constant 0 : i32
    %c0_i32_0 = arith.constant 0 : i32
    %c0_i32_1 = arith.constant 0 : i32
    return %c0_i32, %c0_i32_0 : i32, i32
  }
  func.func @transform_10(%arg0: i32) -> (i32, i32) {
    %c0_i32 = arith.constant 0 : i32
    %c0_i32_0 = arith.constant 0 : i32
    %c0_i32_1 = arith.constant 0 : i32
    return %c0_i32, %c0_i32_0 : i32, i32
  }
  func.func @transform_11(%arg0: i32) -> (i32, i32) {
    %c0_i32 = arith.constant 0 : i32
    %c0_i32_0 = arith.constant 0 : i32
    %c0_i32_1 = arith.constant 0 : i32
    return %c0_i32, %c0_i32_0 : i32, i32
  }
}

</mosaic_0001>

<llo_original>
// kernel: tpu_custom_call.1
$region0: #{tpu_custom_call.1}
  #allocation0 [shape = 'u32[]', space=smem, size = 0x4, offset = 0x4, fixed_abs, tag = 'smem constant byte address 0x4 - core index']
  #allocation1 [shape = 'u32[144,128]{1,0:T(1,128)}', space=vmem, size = 0x12000, scoped, tag = 'internal scratch']
  #allocation2 [shape = 'bf16[96,128]{1,0:T(16,128)(2,1)}', space=vmem, size = 0x6000, scoped, tag = 'scratch operand']
  #allocation3 [shape = 'bf16[96,256]{1,0:T(16,128)(2,1)}', space=vmem, size = 0xc000, scoped, tag = 'scratch operand']
  %s0 = inlined_call_operand.vmem [shape: bf16[80,80], index: 0, kind: input, shape index: {}]
  %s1 = inlined_call_operand.vmem [shape: f32[80,1], index: 1, kind: input, shape index: {}]
  %s2 = inlined_call_operand.vmem [shape: bf16[80,128], index: 2, kind: input, shape index: {}]
  %s3 = inlined_call_operand.vmem [shape: f32[1,128], index: 3, kind: input, shape index: {}]
  %s4 = inlined_call_operand.hbm [shape: bf16[2,256,256], index: 4, kind: input, shape index: {}]
  %s5 = inlined_call_operand.vmem [shape: bf16[128,256], index: 5, kind: input, shape index: {}]
  %s6 = inlined_call_operand.vmem [shape: f32[1,256], index: 6, kind: input, shape index: {}]
  %s7 = inlined_call_operand.hbm [shape: bf16[3,256,256], index: 7, kind: input, shape index: {}]
  %s8 = inlined_call_operand.vmem [shape: f32[1,256], index: 8, kind: input, shape index: {}]
  %s9 = inlined_call_operand.vmem [shape: bf16[256,8], index: 9, kind: input, shape index: {}]
  %s10 = inlined_call_operand.vmem [shape: f32[1,8], index: 10, kind: input, shape index: {}]
  %s11 = inlined_call_operand.hbm [shape: f32[2,8], index: 11, kind: output, shape index: {}]
  %s12 = sld [smem:[#allocation0]]
  $region62: #{tpu_custom_call.1} parent=0
    _
  %s14 = ssub.s32 1, %s12
  %s15 = scalar_select 0, %s14, %s12
  $region1: #{tpu_custom_call.1} parent=0
    #allocation4 [shape = 'u8[262144]{0}', space=vmem, size = 0x40000, scoped, tag = 'input window, operand 4, single buffered']
    #allocation5 [shape = 's32[1]{0}', space=sflag, size = 0x4, scoped, tag = 'scoped memory for tpu_custom_call.1']
    #allocation6 [shape = 's32[1]{0}', space=sflag, size = 0x4, scoped, tag = 'scoped memory for tpu_custom_call.1']
    #allocation7 [shape = 'u8[393216]{0}', space=vmem, size = 0x60000, scoped, tag = 'input window, operand 7, single buffered']
    #allocation8 [shape = 's32[1]{0}', space=sflag, size = 0x4, scoped, tag = 'scoped memory for tpu_custom_call.1']
    #allocation9 [shape = 'u8[1024]{0}', space=vmem, size = 0x400, scoped, tag = 'output window, operand 0, single buffered']
    %16 = vsyncpa [#allocation5], 0
    %17 = vsyncpa [#allocation8], 0
    %18 = vsyncpa [#allocation6], 0
    // Predicated region
    $region2: #{tpu_custom_call.1} parent=1 // pred_check
      _
    $region3: #{tpu_custom_call.1} parent=1 // pred_check_branch
      %20 = sbr.rel (0) target = $region5
    $region4: #{tpu_custom_call.1} parent=1 // pred_region
      _
    $region5: #{tpu_custom_call.1} parent=1 // pred_fallthru
      _
    // Predicated region
    $region6: #{tpu_custom_call.1} parent=1 // pred_check
      _
    $region7: #{tpu_custom_call.1} parent=1 // pred_check_branch
      %22 = sbr.rel (0) target = $region9
    $region8: #{tpu_custom_call.1} parent=1 // pred_region
      _
    $region9: #{tpu_custom_call.1} parent=1 // pred_fallthru
      _
    // Predicated region
    $region10: #{tpu_custom_call.1} parent=1 // pred_check
      _
    $region11: #{tpu_custom_call.1} parent=1 // pred_check_branch
      %24 = sbr.rel (0) target = $region13
    $region12: #{tpu_custom_call.1} parent=1 // pred_region
      _
    $region13: #{tpu_custom_call.1} parent=1 // pred_fallthru
      _
    // Predicated region
    $region14: #{tpu_custom_call.1} parent=1 // pred_check
      _
    $region15: #{tpu_custom_call.1} parent=1 // pred_check_branch
      %26 = sbr.rel (0) target = $region17
    $region16: #{tpu_custom_call.1} parent=1 // pred_region
      _
    $region17: #{tpu_custom_call.1} parent=1 // pred_fallthru
      _
    // Predicated region
    $region18: #{tpu_custom_call.1} parent=1 // pred_check
      _
    $region19: #{tpu_custom_call.1} parent=1 // pred_check_branch
      %28 = sbr.rel (0) target = $region21
    $region20: #{tpu_custom_call.1} parent=1 // pred_region
      %s30 = ssub.s32 8192, 8192
      %31 = vsyncadd [#allocation5], %s30
      %s32 = sshll.u32 [#allocation4], 4
      %s33 = int_to_ptr.vmem [resolvable:$true] %s32
      %38 = dma.hbm_to_vmem [thread:$0]  %s4, 8192, %s33, [#allocation5], 128, 128, 8
    $region21: #{tpu_custom_call.1} parent=1 // pred_fallthru
      _
    // Predicated region
    $region22: #{tpu_custom_call.1} parent=1 // pred_check
      _
    $region23: #{tpu_custom_call.1} parent=1 // pred_check_branch
      %40 = sbr.rel (0) target = $region25
    $region24: #{tpu_custom_call.1} parent=1 // pred_region
      _
    $region25: #{tpu_custom_call.1} parent=1 // pred_fallthru
      _
    // Predicated region
    $region26: #{tpu_custom_call.1} parent=1 // pred_check
      _
    $region27: #{tpu_custom_call.1} parent=1 // pred_check_branch
      %42 = sbr.rel (0) target = $region29
    $region28: #{tpu_custom_call.1} parent=1 // pred_region
      _
    $region29: #{tpu_custom_call.1} parent=1 // pred_fallthru
      _
    // Predicated region
    $region30: #{tpu_custom_call.1} parent=1 // pred_check
      _
    $region31: #{tpu_custom_call.1} parent=1 // pred_check_branch
      %44 = sbr.rel (0) target = $region33
    $region32: #{tpu_custom_call.1} parent=1 // pred_region
      %s46 = ssub.s32 12288, 12288
      %47 = vsyncadd [#allocation8], %s46
      %s48 = sshll.u32 [#allocation7], 4
      %s49 = int_to_ptr.vmem [resolvable:$true] %s48
      %54 = dma.hbm_to_vmem [thread:$0]  %s7, 12288, %s49, [#allocation8], 128, 128, 8
    $region33: #{tpu_custom_call.1} parent=1 // pred_fallthru
      _
    // Predicated region
    $region34: #{tpu_custom_call.1} parent=1 // pred_check
      _
    $region35: #{tpu_custom_call.1} parent=1 // pred_check_branch
      %56 = sbr.rel (0) target = $region37
    $region36: #{tpu_custom_call.1} parent=1 // pred_region
      _
    $region37: #{tpu_custom_call.1} parent=1 // pred_fallthru
      _
    // Predicated region
    $region38: #{tpu_custom_call.1} parent=1 // pred_check
      _
    $region39: #{tpu_custom_call.1} parent=1 // pred_check_branch
      %58 = sbr.rel (0) target = $region41
    $region40: #{tpu_custom_call.1} parent=1 // pred_region
      _
    $region41: #{tpu_custom_call.1} parent=1 // pred_fallthru
      _
    // Predicated region
    $region42: #{tpu_custom_call.1} parent=1 // pred_check
      _
    $region43: #{tpu_custom_call.1} parent=1 // pred_check_branch
      %60 = sbr.rel (0) target = $region45
    $region44: #{tpu_custom_call.1} parent=1 // pred_region
      _
    $region45: #{tpu_custom_call.1} parent=1 // pred_fallthru
      _
    // Predicated region
    $region46: #{tpu_custom_call.1} parent=1 // pred_check
      _
    $region47: #{tpu_custom_call.1} parent=1 // pred_check_branch
      %62 = sbr.rel (0) target = $region49
    $region48: #{tpu_custom_call.1} parent=1 // pred_region
      %63 = dma.done [#allocation5], 8192
    $region49: #{tpu_custom_call.1} parent=1 // pred_fallthru
      _
    // Predicated region
    $region50: #{tpu_custom_call.1} parent=1 // pred_check
      _
    $region51: #{tpu_custom_call.1} parent=1 // pred_check_branch
      %65 = sbr.rel (0) target = $region53
    $region52: #{tpu_custom_call.1} parent=1 // pred_region
      %66 = dma.done [#allocation8], 12288
    $region53: #{tpu_custom_call.1} parent=1 // pred_fallthru
      _
    %v68 = vld [vmem:[%s1] sm:$0xff]
    %v69 = vld [vmem:[%s1 + $0x8] sm:$0xff]
    %v70 = vld [vmem:[%s1 + $0x10] sm:$0xff]
    %v71 = vld [vmem:[%s1 + $0x18] sm:$0xff]
    %v72 = vld [vmem:[%s1 + $0x20] sm:$0xff]
    %v73 = vld [vmem:[%s1 + $0x28] sm:$0xff]
    %v74 = vld [vmem:[%s1 + $0x30] sm:$0xff]
    %v75 = vld [vmem:[%s1 + $0x38] sm:$0xff]
    %v76 = vld [vmem:[%s1 + $0x40] sm:$0xff]
    %v77 = vld [vmem:[%s1 + $0x48] sm:$0xff]
    %78 = vst [vmem:[#allocation2] sm:$0xf] 0
    %79 = vst [vmem:[#allocation2 + $0x28] sm:$0xf0] 0
    %80 = vst [vmem:[#allocation3] sm:$0xf] 0
    %81 = vst [vmem:[#allocation3 + $0x8] sm:$0xf] 0
    %82 = vst [vmem:[#allocation3 + $0x50] sm:$0xf0] 0
    %83 = vst [vmem:[#allocation3 + $0x58] sm:$0xf0] 0
    %v84 = vld [vmem:[%s0] sm:$0xf]
    %v85 = vld [vmem:[%s0 + $0x4] sm:$0xf]
    %v86 = vld [vmem:[%s0 + $0x8] sm:$0xf]
    %v87 = vld [vmem:[%s0 + $0xc] sm:$0xf]
    %v88 = vld [vmem:[%s0 + $0x10] sm:$0xf]
    %v89 = vld [vmem:[%s0 + $0x14] sm:$0xf]
    %v90 = vld [vmem:[%s0 + $0x18] sm:$0xf]
    %v91 = vld [vmem:[%s0 + $0x1c] sm:$0xf]
    %v92 = vld [vmem:[%s0 + $0x20] sm:$0xf]
    %v93 = vld [vmem:[%s0 + $0x24] sm:$0xf]
    %v94 = vld [vmem:[%s2] sm:$0xf]
    %v95 = vld [vmem:[%s2 + $0x4] sm:$0xf]
    %v96 = vld [vmem:[%s2 + $0x8] sm:$0xf]
    %v97 = vld [vmem:[%s2 + $0xc] sm:$0xf]
    %v98 = vld [vmem:[%s2 + $0x10] sm:$0xf]
    %v99 = vld [vmem:[%s2 + $0x14] sm:$0xf]
    %v100 = vld [vmem:[%s2 + $0x18] sm:$0xf]
    %v101 = vld [vmem:[%s2 + $0x1c] sm:$0xf]
    %v102 = vld [vmem:[%s2 + $0x20] sm:$0xf]
    %v103 = vld [vmem:[%s2 + $0x24] sm:$0xf]
    %v104 = vld [vmem:[%s3] sm:$0x1]
    %v106 = vlaneseq
    %v107 = vshrl.u32 %v106, 7
    %v108 = vsub.s32 0, %v107
    %v109 = vrot.slane %v104, %v108
    %v121 = vunpack.c.l.b16 %v84
    %v122 = vunpack.c.l.b16 %v85
    %v123 = vunpack.c.l.b16 %v86
    %v124 = vunpack.c.l.b16 %v87
    %v125 = vunpack.c.l.b16 %v88
    %v126 = vunpack.c.l.b16 %v89
    %v127 = vunpack.c.l.b16 %v90
    %v128 = vunpack.c.l.b16 %v91
    %v129 = vunpack.c.l.b16 %v92
    %v130 = vunpack.c.l.b16 %v93
    %v131 = vpack.c.b16 %v122, %v121
    %v132 = vpack.c.b16 %v124, %v123
    %v133 = vpack.c.b16 %v126, %v125
    %v134 = vpack.c.b16 %v128, %v127
    %v135 = vpack.c.b16 %v130, %v129
    %v146 = vunpack.c.l.b16 %v94
    %v147 = vunpack.c.l.b16 %v95
    %v148 = vunpack.c.l.b16 %v96
    %v149 = vunpack.c.l.b16 %v97
    %v150 = vunpack.c.l.b16 %v98
    %v151 = vunpack.c.l.b16 %v99
    %v152 = vunpack.c.l.b16 %v100
    %v153 = vunpack.c.l.b16 %v101
    %v154 = vunpack.c.l.b16 %v102
    %v155 = vunpack.c.l.b16 %v103
    %v156 = vpack.c.b16 %v147, %v146
    %v157 = vpack.c.b16 %v149, %v148
    %v158 = vpack.c.b16 %v151, %v150
    %v159 = vpack.c.b16 %v153, %v152
    %v160 = vpack.c.b16 %v155, %v154
    %vm166 = vcmask 654336
    %v168 = vsel %vm166, %v131, 0
    %v171 = vsel %vm166, %v132, 0
    %v174 = vsel %vm166, %v133, 0
    %v177 = vsel %vm166, %v134, 0
    %v180 = vsel %vm166, %v135, 0
    %182 = vmatprep.subr.bf16.mxu0 0
    %183 = vmatpush1.bf16.msra.mxu0 %v156
    %184 = vmatprep.subr.bf16.mxu0 0
    %185 = vmatpush1.bf16.msra.mxu0 %v157
    %186 = vmatprep.subr.bf16.mxu0 0
    %187 = vmatpush1.bf16.msra.mxu0 %v158
    %188 = vmatprep.subr.bf16.mxu0 0
    %189 = vmatpush1.bf16.msra.mxu0 %v159
    %190 = vmatprep.subr.bf16.mxu0 0
    %191 = vmatpush1.bf16.msra.mxu0 %v160
    %192 = vmatprep.subr.bf16.mxu0 0
    %193 = vmatpush1.bf16.msra.mxu0 0
    %194 = vmatprep.subr.bf16.mxu0 0
    %195 = vmatpush1.bf16.msra.mxu0 0
    %196 = vmatprep.subr.bf16.mxu0 0
    %197 = vmatpush1.bf16.msra.mxu0 0
    %198 = vmatprep.subr.bf16.mxu0 0
    %199 = vmatpush1.bf16.msra.mxu0 0
    %200 = vmatprep.subr.bf16.mxu0 0
    %201 = vmatpush1.bf16.msra.mxu0 0
    %202 = vmatprep.subr.bf16.mxu0 0
    %203 = vmatpush1.bf16.msra.mxu0 0
    %204 = vmatprep.subr.bf16.mxu0 0
    %205 = vmatpush1.bf16.msra.mxu0 0
    %206 = vmatprep.subr.bf16.mxu0 0
    %207 = vmatpush1.bf16.msra.mxu0 0
    %208 = vmatprep.subr.bf16.mxu0 0
    %209 = vmatpush1.bf16.msra.mxu0 0
    %210 = vmatprep.subr.bf16.mxu0 0
    %211 = vmatpush1.bf16.msra.mxu0 0
    %212 = vmatprep.subr.bf16.mxu0 0
    %213 = vmatpush1.bf16.msra.mxu0 0
    %214 = vmatprep.mubr.bf16.mxu0 0
    %215 = vmatmul.mubr.bf16.gmra.mrb[0].mxu0 %v168
    %v216 = vpop.f32.mrb[0].mxu0
    %v217 = vadd.f32 %v109, %v216
    %v218 = vpop.f32.mrb[0].mxu0
    %v219 = vpop.f32.mrb[0].mxu0
    %v220 = vadd.f32 %v109, %v219
    %v221 = vpop.f32.mrb[0].mxu0
    %222 = vmatprep.mubr.bf16.mxu0 0
    %223 = vmatmul.mubr.bf16.gmra.mrb[0].mxu0 %v171
    %v224 = vpop.f32.mrb[0].mxu0
    %v225 = vadd.f32 %v109, %v224
    %v226 = vpop.f32.mrb[0].mxu0
    %v227 = vpop.f32.mrb[0].mxu0
    %v228 = vadd.f32 %v109, %v227
    %v229 = vpop.f32.mrb[0].mxu0
    %230 = vmatprep.mubr.bf16.mxu0 0
    %231 = vmatmul.mubr.bf16.gmra.mrb[0].mxu0 %v174
    %v232 = vpop.f32.mrb[0].mxu0
    %v233 = vadd.f32 %v109, %v232
    %v234 = vpop.f32.mrb[0].mxu0
    %v235 = vpop.f32.mrb[0].mxu0
    %v236 = vadd.f32 %v109, %v235
    %v237 = vpop.f32.mrb[0].mxu0
    %238 = vmatprep.mubr.bf16.mxu0 0
    %239 = vmatmul.mubr.bf16.gmra.mrb[0].mxu0 %v177
    %v240 = vpop.f32.mrb[0].mxu0
    %v241 = vadd.f32 %v109, %v240
    %v242 = vpop.f32.mrb[0].mxu0
    %v243 = vpop.f32.mrb[0].mxu0
    %v244 = vadd.f32 %v109, %v243
    %v245 = vpop.f32.mrb[0].mxu0
    %246 = vmatprep.mubr.bf16.mxu0 0
    %247 = vmatmul.mubr.bf16.gmra.mrb[0].mxu0 %v180
    %v248 = vpop.f32.mrb[0].mxu0
    %v249 = vadd.f32 %v109, %v248
    %v250 = vpop.f32.mrb[0].mxu0
    %v251 = vpop.f32.mrb[0].mxu0
    %v252 = vadd.f32 %v109, %v251
    %v253 = vpop.f32.mrb[0].mxu0
    %254 = vdwg.mxu0
    %256 = vset.pattern.permute.xlu0 0
    %257 = vperm.xlu0 %256, %v68
    %v258 = vpop.permute.xlu0 %257
    %261 = vset.pattern.permute.xlu0 0
    %262 = vperm.xlu0 %261, %v69
    %v263 = vpop.permute.xlu0 %262
    %266 = vset.pattern.permute.xlu0 0
    %267 = vperm.xlu0 %266, %v70
    %v268 = vpop.permute.xlu0 %267
    %271 = vset.pattern.permute.xlu0 0
    %272 = vperm.xlu0 %271, %v71
    %v273 = vpop.permute.xlu0 %272
    %276 = vset.pattern.permute.xlu0 0
    %277 = vperm.xlu0 %276, %v72
    %v278 = vpop.permute.xlu0 %277
    %281 = vset.pattern.permute.xlu0 0
    %282 = vperm.xlu0 %281, %v73
    %v283 = vpop.permute.xlu0 %282
    %286 = vset.pattern.permute.xlu0 0
    %287 = vperm.xlu0 %286, %v74
    %v288 = vpop.permute.xlu0 %287
    %291 = vset.pattern.permute.xlu0 0
    %292 = vperm.xlu0 %291, %v75
    %v293 = vpop.permute.xlu0 %292
    %296 = vset.pattern.permute.xlu0 0
    %297 = vperm.xlu0 %296, %v76
    %v298 = vpop.permute.xlu0 %297
    %301 = vset.pattern.permute.xlu0 0
    %302 = vperm.xlu0 %301, %v77
    %v303 = vpop.permute.xlu0 %302
    %v305 = vmul.f32 %v217, %v258
    %v306 = vmul.f32 %v220, %v263
    %v307 = vmul.f32 %v225, %v268
    %v308 = vmul.f32 %v228, %v273
    %v309 = vmul.f32 %v233, %v278
    %v310 = vmul.f32 %v236, %v283
    %v311 = vmul.f32 %v241, %v288
    %v312 = vmul.f32 %v244, %v293
    %v313 = vmul.f32 %v249, %v298
    %v314 = vmul.f32 %v252, %v303
    %v315 = vpack.c.bf16 %v306, %v305
    %v316 = vpack.c.bf16 %v308, %v307
    %v317 = vpack.c.bf16 %v310, %v309
    %v318 = vpack.c.bf16 %v312, %v311
    %v319 = vpack.c.bf16 %v314, %v313
    %vm325 = vcmask 1043456
    %v326 = vrot.slane %v315, 4
    %v327 = vrot.slane %v316, 4
    %v328 = vsel %vm325, %v326, %v327
    %v329 = vrot.slane %v317, 4
    %v330 = vsel %vm325, %v327, %v329
    %v331 = vrot.slane %v318, 4
    %v332 = vsel %vm325, %v329, %v331
    %v333 = vrot.slane %v319, 4
    %v334 = vsel %vm325, %v331, %v333
    %341 = vst [vmem:[#allocation2] sm:$0xf0] %v326
    %342 = vst [vmem:[#allocation2 + $0x8] sm:$0xff] %v328
    %343 = vst [vmem:[#allocation2 + $0x10] sm:$0xff] %v330
    %344 = vst [vmem:[#allocation2 + $0x18] sm:$0xff] %v332
    %345 = vst [vmem:[#allocation2 + $0x20] sm:$0xff] %v334
    %346 = vst [vmem:[#allocation2 + $0x28] sm:$0xf] %v333
    %v347 = vld [vmem:[#allocation2] sm:$0xf8]
    %v348 = vld [vmem:[#allocation2 + $0x8] sm:$0xff]
    %v349 = vld [vmem:[#allocation2 + $0x10] sm:$0xff]
    %v350 = vld [vmem:[#allocation2 + $0x18] sm:$0xff]
    %v351 = vld [vmem:[#allocation2 + $0x20] sm:$0xff]
    %v352 = vld [vmem:[#allocation2 + $0x28] sm:$0x7]
    %v353 = vld [vmem:[#allocation2 + $0x28] sm:$0xf]
    %vm354 = vsmask.f32 7424
    %v356 = vshrl.u32 %v347, 16
    %v358 = vshll.u32 %v347, 16
    %v360 = vrot.slane %v358, 1
    %v361 = vor.u32 %v356, %v360
    %v363 = vshll.u32 %v348, 16
    %v365 = vrot.slane %v363, 1
    %v366 = vsel %vm354, %v361, %v365
    %v367 = vshrl.u32 %v348, 16
    %v369 = vor.u32 %v367, %v365
    %v371 = vshll.u32 %v349, 16
    %v373 = vrot.slane %v371, 1
    %v374 = vsel %vm354, %v369, %v373
    %v375 = vshrl.u32 %v349, 16
    %v377 = vor.u32 %v375, %v373
    %v379 = vshll.u32 %v350, 16
    %v381 = vrot.slane %v379, 1
    %v382 = vsel %vm354, %v377, %v381
    %v383 = vshrl.u32 %v350, 16
    %v385 = vor.u32 %v383, %v381
    %v387 = vshll.u32 %v351, 16
    %v389 = vrot.slane %v387, 1
    %v390 = vsel %vm354, %v385, %v389
    %v391 = vshrl.u32 %v351, 16
    %v393 = vor.u32 %v391, %v389
    %v395 = vshll.u32 %v353, 16
    %v397 = vrot.slane %v395, 1
    %v398 = vsel %vm354, %v393, %v397
    %v399 = vshrl.u32 %v353, 16
    %v401 = vor.u32 %v399, %v397
    %v402 = vld [vmem:[#allocation4] sm:$0xff]
    %v403 = vld [vmem:[#allocation4 + $0x8] sm:$0xff]
    %v404 = vld [vmem:[#allocation4 + $0x10] sm:$0xff]
    %v405 = vld [vmem:[#allocation4 + $0x18] sm:$0xff]
    %v406 = vld [vmem:[#allocation4 + $0x20] sm:$0xff]
    %v407 = vld [vmem:[#allocation4 + $0x28] sm:$0xff]
    %v408 = vld [vmem:[#allocation4 + $0x30] sm:$0xff]
    %v409 = vld [vmem:[#allocation4 + $0x38] sm:$0xff]
    %v410 = vld [vmem:[#allocation4 + $0x40] sm:$0xff]
    %v411 = vld [vmem:[#allocation4 + $0x48] sm:$0xff]
    %v412 = vld [vmem:[#allocation4 + $0x50] sm:$0xff]
    %v413 = vld [vmem:[#allocation4 + $0x58] sm:$0xff]
    %v414 = vld [vmem:[#allocation4 + $0x60] sm:$0xff]
    %v415 = vld [vmem:[#allocation4 + $0x68] sm:$0xff]
    %v416 = vld [vmem:[#allocation4 + $0x70] sm:$0xff]
    %v417 = vld [vmem:[#allocation4 + $0x78] sm:$0xff]
    %v418 = vld [vmem:[#allocation4 + $0x80] sm:$0xff]
    %v419 = vld [vmem:[#allocation4 + $0x88] sm:$0xff]
    %v420 = vld [vmem:[#allocation4 + $0x90] sm:$0xff]
    %v421 = vld [vmem:[#allocation4 + $0x98] sm:$0xff]
    %v422 = vld [vmem:[#allocation4 + $0xa0] sm:$0xff]
    %v423 = vld [vmem:[#allocation4 + $0xa8] sm:$0xff]
    %v424 = vld [vmem:[#allocation4 + $0xb0] sm:$0xff]
    %v425 = vld [vmem:[#allocation4 + $0xb8] sm:$0xff]
    %v426 = vld [vmem:[#allocation4 + $0xc0] sm:$0xff]
    %v427 = vld [vmem:[#allocation4 + $0xc8] sm:$0xff]
    %v428 = vld [vmem:[#allocation4 + $0xd0] sm:$0xff]
    %v429 = vld [vmem:[#allocation4 + $0xd8] sm:$0xff]
    %v430 = vld [vmem:[#allocation4 + $0xe0] sm:$0xff]
    %v431 = vld [vmem:[#allocation4 + $0xe8] sm:$0xff]
    %v432 = vld [vmem:[#allocation4 + $0xf0] sm:$0xff]
    %v433 = vld [vmem:[#allocation4 + $0xf8] sm:$0xff]
    %v434 = vld [vmem:[#allocation2] sm:$0xf0]
    %v435 = vld [vmem:[#allocation2 + $0x28] sm:$0x1f]
    %v437 = vshrl.u32 %v434, 16
    %v439 = vshll.u32 %v434, 16
    %v441 = vrot.slane %v439, 1
    %v442 = vor.u32 %v437, %v441
    %v443 = vsel %vm354, %v442, %v365
    %v445 = vshll.u32 %v435, 16
    %v447 = vrot.slane %v445, 1
    %v448 = vsel %vm354, %v393, %v447
    %v449 = vshrl.u32 %v435, 16
    %v451 = vor.u32 %v449, %v447
    %s452 = scalar_lea.vmem [#allocation4], 256
    %v453 = vld [vmem:[%s452] sm:$0xff]
    %v454 = vld [vmem:[%s452 + $0x8] sm:$0xff]
    %v455 = vld [vmem:[%s452 + $0x10] sm:$0xff]
    %v456 = vld [vmem:[%s452 + $0x18] sm:$0xff]
    %v457 = vld [vmem:[%s452 + $0x20] sm:$0xff]
    %v458 = vld [vmem:[%s452 + $0x28] sm:$0xff]
    %v459 = vld [vmem:[%s452 + $0x30] sm:$0xff]
    %v460 = vld [vmem:[%s452 + $0x38] sm:$0xff]
    %v461 = vld [vmem:[%s452 + $0x40] sm:$0xff]
    %v462 = vld [vmem:[%s452 + $0x48] sm:$0xff]
    %v463 = vld [vmem:[%s452 + $0x50] sm:$0xff]
    %v464 = vld [vmem:[%s452 + $0x58] sm:$0xff]
    %v465 = vld [vmem:[%s452 + $0x60] sm:$0xff]
    %v466 = vld [vmem:[%s452 + $0x68] sm:$0xff]
    %v467 = vld [vmem:[%s452 + $0x70] sm:$0xff]
    %v468 = vld [vmem:[%s452 + $0x78] sm:$0xff]
    %v469 = vld [vmem:[%s452 + $0x80] sm:$0xff]
    %v470 = vld [vmem:[%s452 + $0x88] sm:$0xff]
    %v471 = vld [vmem:[%s452 + $0x90] sm:$0xff]
    %v472 = vld [vmem:[%s452 + $0x98] sm:$0xff]
    %v473 = vld [vmem:[%s452 + $0xa0] sm:$0xff]
    %v474 = vld [vmem:[%s452 + $0xa8] sm:$0xff]
    %v475 = vld [vmem:[%s452 + $0xb0] sm:$0xff]
    %v476 = vld [vmem:[%s452 + $0xb8] sm:$0xff]
    %v477 = vld [vmem:[%s452 + $0xc0] sm:$0xff]
    %v478 = vld [vmem:[%s452 + $0xc8] sm:$0xff]
    %v479 = vld [vmem:[%s452 + $0xd0] sm:$0xff]
    %v480 = vld [vmem:[%s452 + $0xd8] sm:$0xff]
    %v481 = vld [vmem:[%s452 + $0xe0] sm:$0xff]
    %v482 = vld [vmem:[%s452 + $0xe8] sm:$0xff]
    %v483 = vld [vmem:[%s452 + $0xf0] sm:$0xff]
    %v484 = vld [vmem:[%s452 + $0xf8] sm:$0xff]
    %v491 = vrot.slane %v434, 4
    %v492 = vrot.slane %v348, 4
    %v493 = vsel %vm325, %v491, %v492
    %v494 = vrot.slane %v443, 4
    %v495 = vrot.slane %v374, 4
    %v496 = vsel %vm325, %v494, %v495
    %v497 = vrot.slane %v349, 4
    %v498 = vsel %vm325, %v492, %v497
    %v499 = vrot.slane %v382, 4
    %v500 = vsel %vm325, %v495, %v499
    %v501 = vrot.slane %v350, 4
    %v502 = vsel %vm325, %v497, %v501
    %v503 = vrot.slane %v390, 4
    %v504 = vsel %vm325, %v499, %v503
    %v505 = vrot.slane %v351, 4
    %v506 = vsel %vm325, %v501, %v505
    %v507 = vrot.slane %v448, 4
    %v508 = vsel %vm325, %v503, %v507
    %v509 = vrot.slane %v353, 4
    %v510 = vsel %vm325, %v505, %v509
    %v511 = vrot.slane %v451, 4
    %v512 = vsel %vm325, %v507, %v511
    %v555 = vunpack.c.l.b16 %v453
    %v556 = vunpack.c.h.b16 %v453
    %v557 = vunpack.c.l.b16 %v454
    %v558 = vunpack.c.h.b16 %v454
    %v559 = vunpack.c.l.b16 %v455
    %v560 = vunpack.c.h.b16 %v455
    %v561 = vunpack.c.l.b16 %v456
    %v562 = vunpack.c.h.b16 %v456
    %v563 = vunpack.c.l.b16 %v457
    %v564 = vunpack.c.h.b16 %v457
    %v565 = vunpack.c.l.b16 %v458
    %v566 = vunpack.c.h.b16 %v458
    %v567 = vunpack.c.l.b16 %v459
    %v568 = vunpack.c.h.b16 %v459
    %v569 = vunpack.c.l.b16 %v460
    %v570 = vunpack.c.h.b16 %v460
    %v571 = vunpack.c.l.b16 %v461
    %v572 = vunpack.c.h.b16 %v461
    %v573 = vunpack.c.l.b16 %v462
    %v574 = vunpack.c.h.b16 %v462
    %v575 = vunpack.c.l.b16 %v463
    %v576 = vunpack.c.h.b16 %v463
    %v577 = vunpack.c.l.b16 %v464
    %v578 = vunpack.c.h.b16 %v464
    %v579 = vunpack.c.l.b16 %v465
    %v580 = vunpack.c.h.b16 %v465
    %v581 = vunpack.c.l.b16 %v466
    %v582 = vunpack.c.h.b16 %v466
    %v583 = vunpack.c.l.b16 %v467
    %v584 = vunpack.c.h.b16 %v467
    %v585 = vunpack.c.l.b16 %v468
    %v586 = vunpack.c.h.b16 %v468
    %v587 = vunpack.c.l.b16 %v469
    %v588 = vunpack.c.h.b16 %v469
    %v589 = vunpack.c.l.b16 %v470
    %v590 = vunpack.c.h.b16 %v470
    %v591 = vunpack.c.l.b16 %v471
    %v592 = vunpack.c.h.b16 %v471
    %v593 = vunpack.c.l.b16 %v472
    %v594 = vunpack.c.h.b16 %v472
    %v595 = vunpack.c.l.b16 %v473
    %v596 = vunpack.c.h.b16 %v473
    %v597 = vunpack.c.l.b16 %v474
    %v598 = vunpack.c.h.b16 %v474
    %v599 = vunpack.c.l.b16 %v475
    %v600 = vunpack.c.h.b16 %v475
    %v601 = vunpack.c.l.b16 %v476
    %v602 = vunpack.c.h.b16 %v476
    %v603 = vunpack.c.l.b16 %v477
    %v604 = vunpack.c.h.b16 %v477
    %v605 = vunpack.c.l.b16 %v478
    %v606 = vunpack.c.h.b16 %v478
    %v607 = vunpack.c.l.b16 %v479
    %v608 = vunpack.c.h.b16 %v479
    %v609 = vunpack.c.l.b16 %v480
    %v610 = vunpack.c.h.b16 %v480
    %v611 = vunpack.c.l.b16 %v481
    %v612 = vunpack.c.h.b16 %v481
    %v613 = vunpack.c.l.b16 %v482
    %v614 = vunpack.c.h.b16 %v482
    %v615 = vunpack.c.l.b16 %v483
    %v616 = vunpack.c.h.b16 %v483
    %v617 = vunpack.c.l.b16 %v484
    %v618 = vunpack.c.h.b16 %v484
    %v619 = vpack.c.b16 %v557, %v555
    %v620 = vpack.c.b16 %v558, %v556
    %v621 = vpack.c.b16 %v561, %v559
    %v622 = vpack.c.b16 %v562, %v560
    %v623 = vpack.c.b16 %v565, %v563
    %v624 = vpack.c.b16 %v566, %v564
    %v625 = vpack.c.b16 %v569, %v567
    %v626 = vpack.c.b16 %v570, %v568
    %v627 = vpack.c.b16 %v573, %v571
    %v628 = vpack.c.b16 %v574, %v572
    %v629 = vpack.c.b16 %v577, %v575
    %v630 = vpack.c.b16 %v578, %v576
    %v631 = vpack.c.b16 %v581, %v579
    %v632 = vpack.c.b16 %v582, %v580
    %v633 = vpack.c.b16 %v585, %v583
    %v634 = vpack.c.b16 %v586, %v584
    %v635 = vpack.c.b16 %v589, %v587
    %v636 = vpack.c.b16 %v590, %v588
    %v637 = vpack.c.b16 %v593, %v591
    %v638 = vpack.c.b16 %v594, %v592
    %v639 = vpack.c.b16 %v597, %v595
    %v640 = vpack.c.b16 %v598, %v596
    %v641 = vpack.c.b16 %v601, %v599
    %v642 = vpack.c.b16 %v602, %v600
    %v643 = vpack.c.b16 %v605, %v603
    %v644 = vpack.c.b16 %v606, %v604
    %v645 = vpack.c.b16 %v609, %v607
    %v646 = vpack.c.b16 %v610, %v608
    %v647 = vpack.c.b16 %v613, %v611
    %v648 = vpack.c.b16 %v614, %v612
    %v649 = vpack.c.b16 %v617, %v615
    %v650 = vpack.c.b16 %v618, %v616
    %683 = vmatprep.subr.bf16.mxu0 %v620
    %684 = vmatpush1.bf16.msra.mxu0 %v619
    %685 = vmatprep.subr.bf16.mxu0 %v622
    %686 = vmatpush1.bf16.msra.mxu0 %v621
    %687 = vmatprep.subr.bf16.mxu0 %v624
    %688 = vmatpush1.bf16.msra.mxu0 %v623
    %689 = vmatprep.subr.bf16.mxu0 %v626
    %690 = vmatpush1.bf16.msra.mxu0 %v625
    %691 = vmatprep.subr.bf16.mxu0 %v628
    %692 = vmatpush1.bf16.msra.mxu0 %v627
    %693 = vmatprep.subr.bf16.mxu0 %v630
    %694 = vmatpush1.bf16.msra.mxu0 %v629
    %695 = vmatprep.subr.bf16.mxu0 %v632
    %696 = vmatpush1.bf16.msra.mxu0 %v631
    %697 = vmatprep.subr.bf16.mxu0 %v634
    %698 = vmatpush1.bf16.msra.mxu0 %v633
    %699 = vmatprep.subr.bf16.mxu0 %v636
    %700 = vmatpush1.bf16.msra.mxu0 %v635
    %701 = vmatprep.subr.bf16.mxu0 %v638
    %702 = vmatpush1.bf16.msra.mxu0 %v637
    %703 = vmatprep.subr.bf16.mxu0 %v640
    %704 = vmatpush1.bf16.msra.mxu0 %v639
    %705 = vmatprep.subr.bf16.mxu0 %v642
    %706 = vmatpush1.bf16.msra.mxu0 %v641
    %707 = vmatprep.subr.bf16.mxu0 %v644
    %708 = vmatpush1.bf16.msra.mxu0 %v643
    %709 = vmatprep.subr.bf16.mxu0 %v646
    %710 = vmatpush1.bf16.msra.mxu0 %v645
    %711 = vmatprep.subr.bf16.mxu0 %v648
    %712 = vmatpush1.bf16.msra.mxu0 %v647
    %713 = vmatprep.subr.bf16.mxu0 %v650
    %714 = vmatpush1.bf16.msra.mxu0 %v649
    %715 = vmatprep.mubr.bf16.mxu0 %v496
    %716 = vmatmul.mubr.bf16.gmra.mrb[0].mxu0 %v493
    %v717 = vpop.f32.mrb[0].mxu0
    %v718 = vadd.f32 0.0, %v717
    %v719 = vpop.f32.mrb[0].mxu0
    %v720 = vadd.f32 0.0, %v719
    %v721 = vpop.f32.mrb[0].mxu0
    %v722 = vadd.f32 0.0, %v721
    %v723 = vpop.f32.mrb[0].mxu0
    %v724 = vadd.f32 0.0, %v723
    %725 = vmatprep.mubr.bf16.mxu0 %v500
    %726 = vmatmul.mubr.bf16.gmra.mrb[0].mxu0 %v498
    %v727 = vpop.f32.mrb[0].mxu0
    %v728 = vadd.f32 0.0, %v727
    %v729 = vpop.f32.mrb[0].mxu0
    %v730 = vadd.f32 0.0, %v729
    %v731 = vpop.f32.mrb[0].mxu0
    %v732 = vadd.f32 0.0, %v731
    %v733 = vpop.f32.mrb[0].mxu0
    %v734 = vadd.f32 0.0, %v733
    %735 = vmatprep.mubr.bf16.mxu0 %v504
    %736 = vmatmul.mubr.bf16.gmra.mrb[0].mxu0 %v502
    %v737 = vpop.f32.mrb[0].mxu0
    %v738 = vadd.f32 0.0, %v737
    %v739 = vpop.f32.mrb[0].mxu0
    %v740 = vadd.f32 0.0, %v739
    %v741 = vpop.f32.mrb[0].mxu0
    %v742 = vadd.f32 0.0, %v741
    %v743 = vpop.f32.mrb[0].mxu0
    %v744 = vadd.f32 0.0, %v743
    %745 = vmatprep.mubr.bf16.mxu0 %v508
    %746 = vmatmul.mubr.bf16.gmra.mrb[0].mxu0 %v506
    %v747 = vpop.f32.mrb[0].mxu0
    %v748 = vadd.f32 0.0, %v747
    %v749 = vpop.f32.mrb[0].mxu0
    %v750 = vadd.f32 0.0, %v749
    %v751 = vpop.f32.mrb[0].mxu0
    %v752 = vadd.f32 0.0, %v751
    %v753 = vpop.f32.mrb[0].mxu0
    %v754 = vadd.f32 0.0, %v753
    %755 = vmatprep.mubr.bf16.mxu0 %v512
    %756 = vmatmul.mubr.bf16.gmra.mrb[0].mxu0 %v510
    %v757 = vpop.f32.mrb[0].mxu0
    %v758 = vadd.f32 0.0, %v757
    %v759 = vpop.f32.mrb[0].mxu0
    %v760 = vadd.f32 0.0, %v759
    %v761 = vpop.f32.mrb[0].mxu0
    %v762 = vadd.f32 0.0, %v761
    %v763 = vpop.f32.mrb[0].mxu0
    %v764 = vadd.f32 0.0, %v763
    %765 = vdwg.mxu0
    %vm768 = vcmask 1044480
    %v769 = vrot.slane %v347, 3
    %v770 = vrot.slane %v348, 3
    %v771 = vsel %vm768, %v769, %v770
    %v772 = vrot.slane %v366, 3
    %v773 = vrot.slane %v374, 3
    %v774 = vsel %vm768, %v772, %v773
    %v775 = vrot.slane %v349, 3
    %v776 = vsel %vm768, %v770, %v775
    %v777 = vrot.slane %v382, 3
    %v778 = vsel %vm768, %v773, %v777
    %v779 = vrot.slane %v350, 3
    %v780 = vsel %vm768, %v775, %v779
    %v781 = vrot.slane %v390, 3
    %v782 = vsel %vm768, %v777, %v781
    %v783 = vrot.slane %v351, 3
    %v784 = vsel %vm768, %v779, %v783
    %v785 = vrot.slane %v398, 3
    %v786 = vsel %vm768, %v781, %v785
    %v787 = vrot.slane %v352, 3
    %v788 = vsel %vm768, %v783, %v787
    %v789 = vrot.slane %v401, 3
    %v790 = vsel %vm768, %v785, %v789
    %v833 = vunpack.c.l.b16 %v402
    %v834 = vunpack.c.h.b16 %v402
    %v835 = vunpack.c.l.b16 %v403
    %v836 = vunpack.c.h.b16 %v403
    %v837 = vunpack.c.l.b16 %v404
    %v838 = vunpack.c.h.b16 %v404
    %v839 = vunpack.c.l.b16 %v405
    %v840 = vunpack.c.h.b16 %v405
    %v841 = vunpack.c.l.b16 %v406
    %v842 = vunpack.c.h.b16 %v406
    %v843 = vunpack.c.l.b16 %v407
    %v844 = vunpack.c.h.b16 %v407
    %v845 = vunpack.c.l.b16 %v408
    %v846 = vunpack.c.h.b16 %v408
    %v847 = vunpack.c.l.b16 %v409
    %v848 = vunpack.c.h.b16 %v409
    %v849 = vunpack.c.l.b16 %v410
    %v850 = vunpack.c.h.b16 %v410
    %v851 = vunpack.c.l.b16 %v411
    %v852 = vunpack.c.h.b16 %v411
    %v853 = vunpack.c.l.b16 %v412
    %v854 = vunpack.c.h.b16 %v412
    %v855 = vunpack.c.l.b16 %v413
    %v856 = vunpack.c.h.b16 %v413
    %v857 = vunpack.c.l.b16 %v414
    %v858 = vunpack.c.h.b16 %v414
    %v859 = vunpack.c.l.b16 %v415
    %v860 = vunpack.c.h.b16 %v415
    %v861 = vunpack.c.l.b16 %v416
    %v862 = vunpack.c.h.b16 %v416
    %v863 = vunpack.c.l.b16 %v417
    %v864 = vunpack.c.h.b16 %v417
    %v865 = vunpack.c.l.b16 %v418
    %v866 = vunpack.c.h.b16 %v418
    %v867 = vunpack.c.l.b16 %v419
    %v868 = vunpack.c.h.b16 %v419
    %v869 = vunpack.c.l.b16 %v420
    %v870 = vunpack.c.h.b16 %v420
    %v871 = vunpack.c.l.b16 %v421
    %v872 = vunpack.c.h.b16 %v421
    %v873 = vunpack.c.l.b16 %v422
    %v874 = vunpack.c.h.b16 %v422
    %v875 = vunpack.c.l.b16 %v423
    %v876 = vunpack.c.h.b16 %v423
    %v877 = vunpack.c.l.b16 %v424
    %v878 = vunpack.c.h.b16 %v424
    %v879 = vunpack.c.l.b16 %v425
    %v880 = vunpack.c.h.b16 %v425
    %v881 = vunpack.c.l.b16 %v426
    %v882 = vunpack.c.h.b16 %v426
    %v883 = vunpack.c.l.b16 %v427
    %v884 = vunpack.c.h.b16 %v427
    %v885 = vunpack.c.l.b16 %v428
    %v886 = vunpack.c.h.b16 %v428
    %v887 = vunpack.c.l.b16 %v429
    %v888 = vunpack.c.h.b16 %v429
    %v889 = vunpack.c.l.b16 %v430
    %v890 = vunpack.c.h.b16 %v430
    %v891 = vunpack.c.l.b16 %v431
    %v892 = vunpack.c.h.b16 %v431
    %v893 = vunpack.c.l.b16 %v432
    %v894 = vunpack.c.h.b16 %v432
    %v895 = vunpack.c.l.b16 %v433
    %v896 = vunpack.c.h.b16 %v433
    %v897 = vpack.c.b16 %v835, %v833
    %v898 = vpack.c.b16 %v836, %v834
    %v899 = vpack.c.b16 %v839, %v837
    %v900 = vpack.c.b16 %v840, %v838
    %v901 = vpack.c.b16 %v843, %v841
    %v902 = vpack.c.b16 %v844, %v842
    %v903 = vpack.c.b16 %v847, %v845
    %v904 = vpack.c.b16 %v848, %v846
    %v905 = vpack.c.b16 %v851, %v849
    %v906 = vpack.c.b16 %v852, %v850
    %v907 = vpack.c.b16 %v855, %v853
    %v908 = vpack.c.b16 %v856, %v854
    %v909 = vpack.c.b16 %v859, %v857
    %v910 = vpack.c.b16 %v860, %v858
    %v911 = vpack.c.b16 %v863, %v861
    %v912 = vpack.c.b16 %v864, %v862
    %v913 = vpack.c.b16 %v867, %v865
    %v914 = vpack.c.b16 %v868, %v866
    %v915 = vpack.c.b16 %v871, %v869
    %v916 = vpack.c.b16 %v872, %v870
    %v917 = vpack.c.b16 %v875, %v873
    %v918 = vpack.c.b16 %v876, %v874
    %v919 = vpack.c.b16 %v879, %v877
    %v920 = vpack.c.b16 %v880, %v878
    %v921 = vpack.c.b16 %v883, %v881
    %v922 = vpack.c.b16 %v884, %v882
    %v923 = vpack.c.b16 %v887, %v885
    %v924 = vpack.c.b16 %v888, %v886
    %v925 = vpack.c.b16 %v891, %v889
    %v926 = vpack.c.b16 %v892, %v890
    %v927 = vpack.c.b16 %v895, %v893
    %v928 = vpack.c.b16 %v896, %v894
    %961 = vmatprep.subr.bf16.mxu0 %v898
    %962 = vmatpush1.bf16.msra.mxu0 %v897
    %963 = vmatprep.subr.bf16.mxu0 %v900
    %964 = vmatpush1.bf16.msra.mxu0 %v899
    %965 = vmatprep.subr.bf16.mxu0 %v902
    %966 = vmatpush1.bf16.msra.mxu0 %v901
    %967 = vmatprep.subr.bf16.mxu0 %v904
    %968 = vmatpush1.bf16.msra.mxu0 %v903
    %969 = vmatprep.subr.bf16.mxu0 %v906
    %970 = vmatpush1.bf16.msra.mxu0 %v905
    %971 = vmatprep.subr.bf16.mxu0 %v908
    %972 = vmatpush1.bf16.msra.mxu0 %v907
    %973 = vmatprep.subr.bf16.mxu0 %v910
    %974 = vmatpush1.bf16.msra.mxu0 %v909
    %975 = vmatprep.subr.bf16.mxu0 %v912
    %976 = vmatpush1.bf16.msra.mxu0 %v911
    %977 = vmatprep.subr.bf16.mxu0 %v914
    %978 = vmatpush1.bf16.msra.mxu0 %v913
    %979 = vmatprep.subr.bf16.mxu0 %v916
    %980 = vmatpush1.bf16.msra.mxu0 %v915
    %981 = vmatprep.subr.bf16.mxu0 %v918
    %982 = vmatpush1.bf16.msra.mxu0 %v917
    %983 = vmatprep.subr.bf16.mxu0 %v920
    %984 = vmatpush1.bf16.msra.mxu0 %v919
    %985 = vmatprep.subr.bf16.mxu0 %v922
    %986 = vmatpush1.bf16.msra.mxu0 %v921
    %987 = vmatprep.subr.bf16.mxu0 %v924
    %988 = vmatpush1.bf16.msra.mxu0 %v923
    %989 = vmatprep.subr.bf16.mxu0 %v926
    %990 = vmatpush1.bf16.msra.mxu0 %v925
    %991 = vmatprep.subr.bf16.mxu0 %v928
    %992 = vmatpush1.bf16.msra.mxu0 %v927
    %993 = vmatprep.mubr.bf16.mxu0 %v774
    %994 = vmatmul.mubr.bf16.gmra.mrb[0].mxu0 %v771
    %v995 = vpop.f32.mrb[0].mxu0
    %v996 = vadd.f32 %v718, %v995
    %v997 = vpop.f32.mrb[0].mxu0
    %v998 = vadd.f32 %v720, %v997
    %v999 = vpop.f32.mrb[0].mxu0
    %v1000 = vadd.f32 %v722, %v999
    %v1001 = vpop.f32.mrb[0].mxu0
    %v1002 = vadd.f32 %v724, %v1001
    %1003 = vmatprep.mubr.bf16.mxu0 %v778
    %1004 = vmatmul.mubr.bf16.gmra.mrb[0].mxu0 %v776
    %v1005 = vpop.f32.mrb[0].mxu0
    %v1006 = vadd.f32 %v728, %v1005
    %v1007 = vpop.f32.mrb[0].mxu0
    %v1008 = vadd.f32 %v730, %v1007
    %v1009 = vpop.f32.mrb[0].mxu0
    %v1010 = vadd.f32 %v732, %v1009
    %v1011 = vpop.f32.mrb[0].mxu0
    %v1012 = vadd.f32 %v734, %v1011
    %1013 = vmatprep.mubr.bf16.mxu0 %v782
    %1014 = vmatmul.mubr.bf16.gmra.mrb[0].mxu0 %v780
    %v1015 = vpop.f32.mrb[0].mxu0
    %v1016 = vadd.f32 %v738, %v1015
    %v1017 = vpop.f32.mrb[0].mxu0
    %v1018 = vadd.f32 %v740, %v1017
    %v1019 = vpop.f32.mrb[0].mxu0
    %v1020 = vadd.f32 %v742, %v1019
    %v1021 = vpop.f32.mrb[0].mxu0
    %v1022 = vadd.f32 %v744, %v1021
    %1023 = vmatprep.mubr.bf16.mxu0 %v786
    %1024 = vmatmul.mubr.bf16.gmra.mrb[0].mxu0 %v784
    %v1025 = vpop.f32.mrb[0].mxu0
    %v1026 = vadd.f32 %v748, %v1025
    %v1027 = vpop.f32.mrb[0].mxu0
    %v1028 = vadd.f32 %v750, %v1027
    %v1029 = vpop.f32.mrb[0].mxu0
    %v1030 = vadd.f32 %v752, %v1029
    %v1031 = vpop.f32.mrb[0].mxu0
    %v1032 = vadd.f32 %v754, %v1031
    %1033 = vmatprep.mubr.bf16.mxu0 %v790
    %1034 = vmatmul.mubr.bf16.gmra.mrb[0].mxu0 %v788
    %v1035 = vpop.f32.mrb[0].mxu0
    %v1036 = vadd.f32 %v758, %v1035
    %v1037 = vpop.f32.mrb[0].mxu0
    %v1038 = vadd.f32 %v760, %v1037
    %v1039 = vpop.f32.mrb[0].mxu0
    %v1040 = vadd.f32 %v762, %v1039
    %v1041 = vpop.f32.mrb[0].mxu0
    %v1042 = vadd.f32 %v764, %v1041
    %1043 = vdwg.mxu0
    %v1044 = vld [vmem:[#allocation2] sm:$0xe0]
    %v1045 = vld [vmem:[%s5] sm:$0xff]
    %v1046 = vld [vmem:[%s5 + $0x8] sm:$0xff]
    %v1047 = vld [vmem:[%s5 + $0x10] sm:$0xff]
    %v1048 = vld [vmem:[%s5 + $0x18] sm:$0xff]
    %v1049 = vld [vmem:[%s5 + $0x20] sm:$0xff]
    %v1050 = vld [vmem:[%s5 + $0x28] sm:$0xff]
    %v1051 = vld [vmem:[%s5 + $0x30] sm:$0xff]
    %v1052 = vld [vmem:[%s5 + $0x38] sm:$0xff]
    %v1053 = vld [vmem:[%s5 + $0x40] sm:$0xff]
    %v1054 = vld [vmem:[%s5 + $0x48] sm:$0xff]
    %v1055 = vld [vmem:[%s5 + $0x50] sm:$0xff]
    %v1056 = vld [vmem:[%s5 + $0x58] sm:$0xff]
    %v1057 = vld [vmem:[%s5 + $0x60] sm:$0xff]
    %v1058 = vld [vmem:[%s5 + $0x68] sm:$0xff]
    %v1059 = vld [vmem:[%s5 + $0x70] sm:$0xff]
    %v1060 = vld [vmem:[%s5 + $0x78] sm:$0xff]
    %vm1063 = vcmask 1042432
    %v1064 = vrot.slane %v1044, 5
    %v1065 = vrot.slane %v348, 5
    %v1066 = vsel %vm1063, %v1064, %v1065
    %v1067 = vrot.slane %v349, 5
    %v1068 = vsel %vm1063, %v1065, %v1067
    %v1069 = vrot.slane %v350, 5
    %v1070 = vsel %vm1063, %v1067, %v1069
    %v1071 = vrot.slane %v351, 5
    %v1072 = vsel %vm1063, %v1069, %v1071
    %v1073 = vrot.slane %v435, 5
    %v1074 = vsel %vm1063, %v1071, %v1073
    %v1096 = vunpack.c.l.b16 %v1045
    %v1097 = vunpack.c.h.b16 %v1045
    %v1098 = vunpack.c.l.b16 %v1046
    %v1099 = vunpack.c.h.b16 %v1046
    %v1100 = vunpack.c.l.b16 %v1047
    %v1101 = vunpack.c.h.b16 %v1047
    %v1102 = vunpack.c.l.b16 %v1048
    %v1103 = vunpack.c.h.b16 %v1048
    %v1104 = vunpack.c.l.b16 %v1049
    %v1105 = vunpack.c.h.b16 %v1049
    %v1106 = vunpack.c.l.b16 %v1050
    %v1107 = vunpack.c.h.b16 %v1050
    %v1108 = vunpack.c.l.b16 %v1051
    %v1109 = vunpack.c.h.b16 %v1051
    %v1110 = vunpack.c.l.b16 %v1052
    %v1111 = vunpack.c.h.b16 %v1052
    %v1112 = vunpack.c.l.b16 %v1053
    %v1113 = vunpack.c.h.b16 %v1053
    %v1114 = vunpack.c.l.b16 %v1054
    %v1115 = vunpack.c.h.b16 %v1054
    %v1116 = vunpack.c.l.b16 %v1055
    %v1117 = vunpack.c.h.b16 %v1055
    %v1118 = vunpack.c.l.b16 %v1056
    %v1119 = vunpack.c.h.b16 %v1056
    %v1120 = vunpack.c.l.b16 %v1057
    %v1121 = vunpack.c.h.b16 %v1057
    %v1122 = vunpack.c.l.b16 %v1058
    %v1123 = vunpack.c.h.b16 %v1058
    %v1124 = vunpack.c.l.b16 %v1059
    %v1125 = vunpack.c.h.b16 %v1059
    %v1126 = vunpack.c.l.b16 %v1060
    %v1127 = vunpack.c.h.b16 %v1060
    %v1128 = vpack.c.b16 %v1098, %v1096
    %v1129 = vpack.c.b16 %v1099, %v1097
    %v1130 = vpack.c.b16 %v1102, %v1100
    %v1131 = vpack.c.b16 %v1103, %v1101
    %v1132 = vpack.c.b16 %v1106, %v1104
    %v1133 = vpack.c.b16 %v1107, %v1105
    %v1134 = vpack.c.b16 %v1110, %v1108
    %v1135 = vpack.c.b16 %v1111, %v1109
    %v1136 = vpack.c.b16 %v1114, %v1112
    %v1137 = vpack.c.b16 %v1115, %v1113
    %v1138 = vpack.c.b16 %v1118, %v1116
    %v1139 = vpack.c.b16 %v1119, %v1117
    %v1140 = vpack.c.b16 %v1122, %v1120
    %v1141 = vpack.c.b16 %v1123, %v1121
    %v1142 = vpack.c.b16 %v1126, %v1124
    %v1143 = vpack.c.b16 %v1127, %v1125
    %1160 = vmatprep.subr.bf16.mxu0 %v1129
    %1161 = vmatpush1.bf16.msra.mxu0 %v1128
    %1162 = vmatprep.subr.bf16.mxu0 %v1131
    %1163 = vmatpush1.bf16.msra.mxu0 %v1130
    %1164 = vmatprep.subr.bf16.mxu0 %v1133
    %1165 = vmatpush1.bf16.msra.mxu0 %v1132
    %1166 = vmatprep.subr.bf16.mxu0 %v1135
    %1167 = vmatpush1.bf16.msra.mxu0 %v1134
    %1168 = vmatprep.subr.bf16.mxu0 %v1137
    %1169 = vmatpush1.bf16.msra.mxu0 %v1136
    %1170 = vmatprep.subr.bf16.mxu0 %v1139
    %1171 = vmatpush1.bf16.msra.mxu0 %v1138
    %1172 = vmatprep.subr.bf16.mxu0 %v1141
    %1173 = vmatpush1.bf16.msra.mxu0 %v1140
    %1174 = vmatprep.subr.bf16.mxu0 %v1143
    %1175 = vmatpush1.bf16.msra.mxu0 %v1142
    %1176 = vmatprep.subr.bf16.mxu0 0
    %1177 = vmatpush1.bf16.msra.mxu0 0
    %1178 = vmatprep.subr.bf16.mxu0 0
    %1179 = vmatpush1.bf16.msra.mxu0 0
    %1180 = vmatprep.subr.bf16.mxu0 0
    %1181 = vmatpush1.bf16.msra.mxu0 0
    %1182 = vmatprep.subr.bf16.mxu0 0
    %1183 = vmatpush1.bf16.msra.mxu0 0
    %1184 = vmatprep.subr.bf16.mxu0 0
    %1185 = vmatpush1.bf16.msra.mxu0 0
    %1186 = vmatprep.subr.bf16.mxu0 0
    %1187 = vmatpush1.bf16.msra.mxu0 0
    %1188 = vmatprep.subr.bf16.mxu0 0
    %1189 = vmatpush1.bf16.msra.mxu0 0
    %1190 = vmatprep.subr.bf16.mxu0 0
    %1191 = vmatpush1.bf16.msra.mxu0 0
    %1192 = vmatprep.mubr.bf16.mxu0 0
    %1193 = vmatmul.mubr.bf16.gmra.mrb[0].mxu0 %v1066
    %v1194 = vpop.f32.mrb[0].mxu0
    %v1195 = vadd.f32 0.0, %v1194
    %v1196 = vpop.f32.mrb[0].mxu0
    %v1197 = vadd.f32 0.0, %v1196
    %v1198 = vpop.f32.mrb[0].mxu0
    %v1199 = vadd.f32 0.0, %v1198
    %v1200 = vpop.f32.mrb[0].mxu0
    %v1201 = vadd.f32 0.0, %v1200
    %1202 = vmatprep.mubr.bf16.mxu0 0
    %1203 = vmatmul.mubr.bf16.gmra.mrb[0].mxu0 %v1068
    %v1204 = vpop.f32.mrb[0].mxu0
    %v1205 = vadd.f32 0.0, %v1204
    %v1206 = vpop.f32.mrb[0].mxu0
    %v1207 = vadd.f32 0.0, %v1206
    %v1208 = vpop.f32.mrb[0].mxu0
    %v1209 = vadd.f32 0.0, %v1208
    %v1210 = vpop.f32.mrb[0].mxu0
    %v1211 = vadd.f32 0.0, %v1210
    %1212 = vmatprep.mubr.bf16.mxu0 0
    %1213 = vmatmul.mubr.bf16.gmra.mrb[0].mxu0 %v1070
    %v1214 = vpop.f32.mrb[0].mxu0
    %v1215 = vadd.f32 0.0, %v1214
    %v1216 = vpop.f32.mrb[0].mxu0
    %v1217 = vadd.f32 0.0, %v1216
    %v1218 = vpop.f32.mrb[0].mxu0
    %v1219 = vadd.f32 0.0, %v1218
    %v1220 = vpop.f32.mrb[0].mxu0
    %v1221 = vadd.f32 0.0, %v1220
    %1222 = vmatprep.mubr.bf16.mxu0 0
    %1223 = vmatmul.mubr.bf16.gmra.mrb[0].mxu0 %v1072
    %v1224 = vpop.f32.mrb[0].mxu0
    %v1225 = vadd.f32 0.0, %v1224
    %v1226 = vpop.f32.mrb[0].mxu0
    %v1227 = vadd.f32 0.0, %v1226
    %v1228 = vpop.f32.mrb[0].mxu0
    %v1229 = vadd.f32 0.0, %v1228
    %v1230 = vpop.f32.mrb[0].mxu0
    %v1231 = vadd.f32 0.0, %v1230
    %1232 = vmatprep.mubr.bf16.mxu0 0
    %1233 = vmatmul.mubr.bf16.gmra.mrb[0].mxu0 %v1074
    %v1234 = vpop.f32.mrb[0].mxu0
    %v1235 = vadd.f32 0.0, %v1234
    %v1236 = vpop.f32.mrb[0].mxu0
    %v1237 = vadd.f32 0.0, %v1236
    %v1238 = vpop.f32.mrb[0].mxu0
    %v1239 = vadd.f32 0.0, %v1238
    %v1240 = vpop.f32.mrb[0].mxu0
    %v1241 = vadd.f32 0.0, %v1240
    %1242 = vdwg.mxu0
    %v1243 = vadd.f32 %v996, %v1195
    %v1244 = vadd.f32 %v998, %v1197
    %v1245 = vadd.f32 %v1000, %v1199
    %v1246 = vadd.f32 %v1002, %v1201
    %v1247 = vadd.f32 %v1006, %v1205
    %v1248 = vadd.f32 %v1008, %v1207
    %v1249 = vadd.f32 %v1010, %v1209
    %v1250 = vadd.f32 %v1012, %v1211
    %v1251 = vadd.f32 %v1016, %v1215
    %v1252 = vadd.f32 %v1018, %v1217
    %v1253 = vadd.f32 %v1020, %v1219
    %v1254 = vadd.f32 %v1022, %v1221
    %v1255 = vadd.f32 %v1026, %v1225
    %v1256 = vadd.f32 %v1028, %v1227
    %v1257 = vadd.f32 %v1030, %v1229
    %v1258 = vadd.f32 %v1032, %v1231
    %v1259 = vadd.f32 %v1036, %v1235
    %v1260 = vadd.f32 %v1038, %v1237
    %v1261 = vadd.f32 %v1040, %v1239
    %v1262 = vadd.f32 %v1042, %v1241
    %v1263 = vld [vmem:[%s6] sm:$0x3]
    %v1265 = vlaneseq
    %v1266 = vshrl.u32 %v1265, 7
    %v1267 = vsub.s32 0, %v1266
    %v1268 = vrot.slane %v1263, %v1267
    %v1269 = vlaneseq
    %v1270 = vshrl.u32 %v1269, 7
    %v1271 = vsub.s32 1, %v1270
    %v1272 = vrot.slane %v1263, %v1271
    %v1275 = vadd.f32 %v1243, %v1268
    %v1276 = vadd.f32 %v1244, %v1272
    %v1277 = vadd.f32 %v1245, %v1268
    %v1278 = vadd.f32 %v1246, %v1272
    %v1279 = vadd.f32 %v1247, %v1268
    %v1280 = vadd.f32 %v1248, %v1272
    %v1281 = vadd.f32 %v1249, %v1268
    %v1282 = vadd.f32 %v1250, %v1272
    %v1283 = vadd.f32 %v1251, %v1268
    %v1284 = vadd.f32 %v1252, %v1272
    %v1285 = vadd.f32 %v1253, %v1268
    %v1286 = vadd.f32 %v1254, %v1272
    %v1287 = vadd.f32 %v1255, %v1268
    %v1288 = vadd.f32 %v1256, %v1272
    %v1289 = vadd.f32 %v1257, %v1268
    %v1290 = vadd.f32 %v1258, %v1272
    %v1291 = vadd.f32 %v1259, %v1268
    %v1292 = vadd.f32 %v1260, %v1272
    %v1293 = vadd.f32 %v1261, %v1268
    %v1294 = vadd.f32 %v1262, %v1272
    %v1295 = vmax.f32 %v1275, 0.0
    %v1296 = vmax.f32 %v1276, 0.0
    %v1297 = vmax.f32 %v1277, 0.0
    %v1298 = vmax.f32 %v1278, 0.0
    %v1299 = vmax.f32 %v1279, 0.0
    %v1300 = vmax.f32 %v1280, 0.0
    %v1301 = vmax.f32 %v1281, 0.0
    %v1302 = vmax.f32 %v1282, 0.0
    %v1303 = vmax.f32 %v1283, 0.0
    %v1304 = vmax.f32 %v1284, 0.0
    %v1305 = vmax.f32 %v1285, 0.0
    %v1306 = vmax.f32 %v1286, 0.0
    %v1307 = vmax.f32 %v1287, 0.0
    %v1308 = vmax.f32 %v1288, 0.0
    %v1309 = vmax.f32 %v1289, 0.0
    %v1310 = vmax.f32 %v1290, 0.0
    %v1311 = vmax.f32 %v1291, 0.0
    %v1312 = vmax.f32 %v1292, 0.0
    %v1313 = vmax.f32 %v1293, 0.0
    %v1314 = vmax.f32 %v1294, 0.0
    %v1315 = vmul.f32 %v1295, %v258
    %v1316 = vmul.f32 %v1296, %v258
    %v1317 = vmul.f32 %v1297, %v263
    %v1318 = vmul.f32 %v1298, %v263
    %v1319 = vmul.f32 %v1299, %v268
    %v1320 = vmul.f32 %v1300, %v268
    %v1321 = vmul.f32 %v1301, %v273
    %v1322 = vmul.f32 %v1302, %v273
    %v1323 = vmul.f32 %v1303, %v278
    %v1324 = vmul.f32 %v1304, %v278
    %v1325 = vmul.f32 %v1305, %v283
    %v1326 = vmul.f32 %v1306, %v283
    %v1327 = vmul.f32 %v1307, %v288
    %v1328 = vmul.f32 %v1308, %v288
    %v1329 = vmul.f32 %v1309, %v293
    %v1330 = vmul.f32 %v1310, %v293
    %v1331 = vmul.f32 %v1311, %v298
    %v1332 = vmul.f32 %v1312, %v298
    %v1333 = vmul.f32 %v1313, %v303
    %v1334 = vmul.f32 %v1314, %v303
    %v1335 = vpack.c.bf16 %v1317, %v1315
    %v1336 = vpack.c.bf16 %v1318, %v1316
    %v1337 = vpack.c.bf16 %v1321, %v1319
    %v1338 = vpack.c.bf16 %v1322, %v1320
    %v1339 = vpack.c.bf16 %v1325, %v1323
    %v1340 = vpack.c.bf16 %v1326, %v1324
    %v1341 = vpack.c.bf16 %v1329, %v1327
    %v1342 = vpack.c.bf16 %v1330, %v1328
    %v1343 = vpack.c.bf16 %v1333, %v1331
    %v1344 = vpack.c.bf16 %v1334, %v1332
    %v1355 = vrot.slane %v1335, 4
    %v1356 = vrot.slane %v1336, 4
    %v1357 = vrot.slane %v1337, 4
    %v1358 = vsel %vm325, %v1355, %v1357
    %v1359 = vrot.slane %v1338, 4
    %v1360 = vsel %vm325, %v1356, %v1359
    %v1361 = vrot.slane %v1339, 4
    %v1362 = vsel %vm325, %v1357, %v1361
    %v1363 = vrot.slane %v1340, 4
    %v1364 = vsel %vm325, %v1359, %v1363
    %v1365 = vrot.slane %v1341, 4
    %v1366 = vsel %vm325, %v1361, %v1365
    %v1367 = vrot.slane %v1342, 4
    %v1368 = vsel %vm325, %v1363, %v1367
    %v1369 = vrot.slane %v1343, 4
    %v1370 = vsel %vm325, %v1365, %v1369
    %v1371 = vrot.slane %v1344, 4
    %v1372 = vsel %vm325, %v1367, %v1371
    %1385 = vst [vmem:[#allocation3] sm:$0xf0] %v1355
    %1386 = vst [vmem:[#allocation3 + $0x8] sm:$0xf0] %v1356
    %1387 = vst [vmem:[#allocation3 + $0x10] sm:$0xff] %v1358
    %1388 = vst [vmem:[#allocation3 + $0x18] sm:$0xff] %v1360
    %1389 = vst [vmem:[#allocation3 + $0x20] sm:$0xff] %v1362
    %1390 = vst [vmem:[#allocation3 + $0x28] sm:$0xff] %v1364
    %1391 = vst [vmem:[#allocation3 + $0x30] sm:$0xff] %v1366
    %1392 = vst [vmem:[#allocation3 + $0x38] sm:$0xff] %v1368
    %1393 = vst [vmem:[#allocation3 + $0x40] sm:$0xff] %v1370
    %1394 = vst [vmem:[#allocation3 + $0x48] sm:$0xff] %v1372
    %1395 = vst [vmem:[#allocation3 + $0x50] sm:$0xf] %v1369
    %1396 = vst [vmem:[#allocation3 + $0x58] sm:$0xf] %v1371
    %v1397 = vld [vmem:[#allocation3] sm:$0xf8]
    %v1398 = vld [vmem:[#allocation3 + $0x8] sm:$0xf8]
    %v1399 = vld [vmem:[#allocation3 + $0x10] sm:$0xff]
    %v1400 = vld [vmem:[#allocation3 + $0x18] sm:$0xff]
    %v1401 = vld [vmem:[#allocation3 + $0x20] sm:$0xff]
    %v1402 = vld [vmem:[#allocation3 + $0x28] sm:$0xff]
    %v1403 = vld [vmem:[#allocation3 + $0x30] sm:$0xff]
    %v1404 = vld [vmem:[#allocation3 + $0x38] sm:$0xff]
    %v1405 = vld [vmem:[#allocation3 + $0x40] sm:$0xff]
    %v1406 = vld [vmem:[#allocation3 + $0x48] sm:$0xff]
    %v1407 = vld [vmem:[#allocation3 + $0x50] sm:$0xf]
    %v1408 = vld [vmem:[#allocation3 + $0x58] sm:$0xf]
    %v1409 = vld [vmem:[#allocation7] sm:$0xff]
    %v1410 = vld [vmem:[#allocation7 + $0x8] sm:$0xff]
    %v1411 = vld [vmem:[#allocation7 + $0x10] sm:$0xff]
    %v1412 = vld [vmem:[#allocation7 + $0x18] sm:$0xff]
    %v1413 = vld [vmem:[#allocation7 + $0x20] sm:$0xff]
    %v1414 = vld [vmem:[#allocation7 + $0x28] sm:$0xff]
    %v1415 = vld [vmem:[#allocation7 + $0x30] sm:$0xff]
    %v1416 = vld [vmem:[#allocation7 + $0x38] sm:$0xff]
    %v1417 = vld [vmem:[#allocation7 + $0x40] sm:$0xff]
    %v1418 = vld [vmem:[#allocation7 + $0x48] sm:$0xff]
    %v1419 = vld [vmem:[#allocation7 + $0x50] sm:$0xff]
    %v1420 = vld [vmem:[#allocation7 + $0x58] sm:$0xff]
    %v1421 = vld [vmem:[#allocation7 + $0x60] sm:$0xff]
    %v1422 = vld [vmem:[#allocation7 + $0x68] sm:$0xff]
    %v1423 = vld [vmem:[#allocation7 + $0x70] sm:$0xff]
    %v1424 = vld [vmem:[#allocation7 + $0x78] sm:$0xff]
    %v1425 = vld [vmem:[#allocation7 + $0x80] sm:$0xff]
    %v1426 = vld [vmem:[#allocation7 + $0x88] sm:$0xff]
    %v1427 = vld [vmem:[#allocation7 + $0x90] sm:$0xff]
    %v1428 = vld [vmem:[#allocation7 + $0x98] sm:$0xff]
    %v1429 = vld [vmem:[#allocation7 + $0xa0] sm:$0xff]
    %v1430 = vld [vmem:[#allocation7 + $0xa8] sm:$0xff]
    %v1431 = vld [vmem:[#allocation7 + $0xb0] sm:$0xff]
    %v1432 = vld [vmem:[#allocation7 + $0xb8] sm:$0xff]
    %v1433 = vld [vmem:[#allocation7 + $0xc0] sm:$0xff]
    %v1434 = vld [vmem:[#allocation7 + $0xc8] sm:$0xff]
    %v1435 = vld [vmem:[#allocation7 + $0xd0] sm:$0xff]
    %v1436 = vld [vmem:[#allocation7 + $0xd8] sm:$0xff]
    %v1437 = vld [vmem:[#allocation7 + $0xe0] sm:$0xff]
    %v1438 = vld [vmem:[#allocation7 + $0xe8] sm:$0xff]
    %v1439 = vld [vmem:[#allocation7 + $0xf0] sm:$0xff]
    %v1440 = vld [vmem:[#allocation7 + $0xf8] sm:$0xff]
    %v1441 = vld [vmem:[#allocation3] sm:$0xf0]
    %v1442 = vld [vmem:[#allocation3 + $0x8] sm:$0xf0]
    %s1443 = scalar_lea.vmem [#allocation7], 256
    %v1444 = vld [vmem:[%s1443] sm:$0xff]
    %v1445 = vld [vmem:[%s1443 + $0x8] sm:$0xff]
    %v1446 = vld [vmem:[%s1443 + $0x10] sm:$0xff]
    %v1447 = vld [vmem:[%s1443 + $0x18] sm:$0xff]
    %v1448 = vld [vmem:[%s1443 + $0x20] sm:$0xff]
    %v1449 = vld [vmem:[%s1443 + $0x28] sm:$0xff]
    %v1450 = vld [vmem:[%s1443 + $0x30] sm:$0xff]
    %v1451 = vld [vmem:[%s1443 + $0x38] sm:$0xff]
    %v1452 = vld [vmem:[%s1443 + $0x40] sm:$0xff]
    %v1453 = vld [vmem:[%s1443 + $0x48] sm:$0xff]
    %v1454 = vld [vmem:[%s1443 + $0x50] sm:$0xff]
    %v1455 = vld [vmem:[%s1443 + $0x58] sm:$0xff]
    %v1456 = vld [vmem:[%s1443 + $0x60] sm:$0xff]
    %v1457 = vld [vmem:[%s1443 + $0x68] sm:$0xff]
    %v1458 = vld [vmem:[%s1443 + $0x70] sm:$0xff]
    %v1459 = vld [vmem:[%s1443 + $0x78] sm:$0xff]
    %v1460 = vld [vmem:[%s1443 + $0x80] sm:$0xff]
    %v1461 = vld [vmem:[%s1443 + $0x88] sm:$0xff]
    %v1462 = vld [vmem:[%s1443 + $0x90] sm:$0xff]
    %v1463 = vld [vmem:[%s1443 + $0x98] sm:$0xff]
    %v1464 = vld [vmem:[%s1443 + $0xa0] sm:$0xff]
    %v1465 = vld [vmem:[%s1443 + $0xa8] sm:$0xff]
    %v1466 = vld [vmem:[%s1443 + $0xb0] sm:$0xff]
    %v1467 = vld [vmem:[%s1443 + $0xb8] sm:$0xff]
    %v1468 = vld [vmem:[%s1443 + $0xc0] sm:$0xff]
    %v1469 = vld [vmem:[%s1443 + $0xc8] sm:$0xff]
    %v1470 = vld [vmem:[%s1443 + $0xd0] sm:$0xff]
    %v1471 = vld [vmem:[%s1443 + $0xd8] sm:$0xff]
    %v1472 = vld [vmem:[%s1443 + $0xe0] sm:$0xff]
    %v1473 = vld [vmem:[%s1443 + $0xe8] sm:$0xff]
    %v1474 = vld [vmem:[%s1443 + $0xf0] sm:$0xff]
    %v1475 = vld [vmem:[%s1443 + $0xf8] sm:$0xff]
    %v1488 = vrot.slane %v1441, 4
    %v1489 = vrot.slane %v1399, 4
    %v1490 = vsel %vm325, %v1488, %v1489
    %v1491 = vrot.slane %v1442, 4
    %v1492 = vrot.slane %v1400, 4
    %v1493 = vsel %vm325, %v1491, %v1492
    %v1494 = vrot.slane %v1401, 4
    %v1495 = vsel %vm325, %v1489, %v1494
    %v1496 = vrot.slane %v1402, 4
    %v1497 = vsel %vm325, %v1492, %v1496
    %v1498 = vrot.slane %v1403, 4
    %v1499 = vsel %vm325, %v1494, %v1498
    %v1500 = vrot.slane %v1404, 4
    %v1501 = vsel %vm325, %v1496, %v1500
    %v1502 = vrot.slane %v1405, 4
    %v1503 = vsel %vm325, %v1498, %v1502
    %v1504 = vrot.slane %v1406, 4
    %v1505 = vsel %vm325, %v1500, %v1504
    %v1506 = vrot.slane %v1407, 4
    %v1507 = vsel %vm325, %v1502, %v1506
    %v1508 = vrot.slane %v1408, 4
    %v1509 = vsel %vm325, %v1504, %v1508
    %v1552 = vunpack.c.l.b16 %v1444
    %v1553 = vunpack.c.h.b16 %v1444
    %v1554 = vunpack.c.l.b16 %v1445
    %v1555 = vunpack.c.h.b16 %v1445
    %v1556 = vunpack.c.l.b16 %v1446
    %v1557 = vunpack.c.h.b16 %v1446
    %v1558 = vunpack.c.l.b16 %v1447
    %v1559 = vunpack.c.h.b16 %v1447
    %v1560 = vunpack.c.l.b16 %v1448
    %v1561 = vunpack.c.h.b16 %v1448
    %v1562 = vunpack.c.l.b16 %v1449
    %v1563 = vunpack.c.h.b16 %v1449
    %v1564 = vunpack.c.l.b16 %v1450
    %v1565 = vunpack.c.h.b16 %v1450
    %v1566 = vunpack.c.l.b16 %v1451
    %v1567 = vunpack.c.h.b16 %v1451
    %v1568 = vunpack.c.l.b16 %v1452
    %v1569 = vunpack.c.h.b16 %v1452
    %v1570 = vunpack.c.l.b16 %v1453
    %v1571 = vunpack.c.h.b16 %v1453
    %v1572 = vunpack.c.l.b16 %v1454
    %v1573 = vunpack.c.h.b16 %v1454
    %v1574 = vunpack.c.l.b16 %v1455
    %v1575 = vunpack.c.h.b16 %v1455
    %v1576 = vunpack.c.l.b16 %v1456
    %v1577 = vunpack.c.h.b16 %v1456
    %v1578 = vunpack.c.l.b16 %v1457
    %v1579 = vunpack.c.h.b16 %v1457
    %v1580 = vunpack.c.l.b16 %v1458
    %v1581 = vunpack.c.h.b16 %v1458
    %v1582 = vunpack.c.l.b16 %v1459
    %v1583 = vunpack.c.h.b16 %v1459
    %v1584 = vunpack.c.l.b16 %v1460
    %v1585 = vunpack.c.h.b16 %v1460
    %v1586 = vunpack.c.l.b16 %v1461
    %v1587 = vunpack.c.h.b16 %v1461
    %v1588 = vunpack.c.l.b16 %v1462
    %v1589 = vunpack.c.h.b16 %v1462
    %v1590 = vunpack.c.l.b16 %v1463
    %v1591 = vunpack.c.h.b16 %v1463
    %v1592 = vunpack.c.l.b16 %v1464
    %v1593 = vunpack.c.h.b16 %v1464
    %v1594 = vunpack.c.l.b16 %v1465
    %v1595 = vunpack.c.h.b16 %v1465
    %v1596 = vunpack.c.l.b16 %v1466
    %v1597 = vunpack.c.h.b16 %v1466
    %v1598 = vunpack.c.l.b16 %v1467
    %v1599 = vunpack.c.h.b16 %v1467
    %v1600 = vunpack.c.l.b16 %v1468
    %v1601 = vunpack.c.h.b16 %v1468
    %v1602 = vunpack.c.l.b16 %v1469
    %v1603 = vunpack.c.h.b16 %v1469
    %v1604 = vunpack.c.l.b16 %v1470
    %v1605 = vunpack.c.h.b16 %v1470
    %v1606 = vunpack.c.l.b16 %v1471
    %v1607 = vunpack.c.h.b16 %v1471
    %v1608 = vunpack.c.l.b16 %v1472
    %v1609 = vunpack.c.h.b16 %v1472
    %v1610 = vunpack.c.l.b16 %v1473
    %v1611 = vunpack.c.h.b16 %v1473
    %v1612 = vunpack.c.l.b16 %v1474
    %v1613 = vunpack.c.h.b16 %v1474
    %v1614 = vunpack.c.l.b16 %v1475
    %v1615 = vunpack.c.h.b16 %v1475
    %v1616 = vpack.c.b16 %v1554, %v1552
    %v1617 = vpack.c.b16 %v1555, %v1553
    %v1618 = vpack.c.b16 %v1558, %v1556
    %v1619 = vpack.c.b16 %v1559, %v1557
    %v1620 = vpack.c.b16 %v1562, %v1560
    %v1621 = vpack.c.b16 %v1563, %v1561
    %v1622 = vpack.c.b16 %v1566, %v1564
    %v1623 = vpack.c.b16 %v1567, %v1565
    %v1624 = vpack.c.b16 %v1570, %v1568
    %v1625 = vpack.c.b16 %v1571, %v1569
    %v1626 = vpack.c.b16 %v1574, %v1572
    %v1627 = vpack.c.b16 %v1575, %v1573
    %v1628 = vpack.c.b16 %v1578, %v1576
    %v1629 = vpack.c.b16 %v1579, %v1577
    %v1630 = vpack.c.b16 %v1582, %v1580
    %v1631 = vpack.c.b16 %v1583, %v1581
    %v1632 = vpack.c.b16 %v1586, %v1584
    %v1633 = vpack.c.b16 %v1587, %v1585
    %v1634 = vpack.c.b16 %v1590, %v1588
    %v1635 = vpack.c.b16 %v1591, %v1589
    %v1636 = vpack.c.b16 %v1594, %v1592
    %v1637 = vpack.c.b16 %v1595, %v1593
    %v1638 = vpack.c.b16 %v1598, %v1596
    %v1639 = vpack.c.b16 %v1599, %v1597
    %v1640 = vpack.c.b16 %v1602, %v1600
    %v1641 = vpack.c.b16 %v1603, %v1601
    %v1642 = vpack.c.b16 %v1606, %v1604
    %v1643 = vpack.c.b16 %v1607, %v1605
    %v1644 = vpack.c.b16 %v1610, %v1608
    %v1645 = vpack.c.b16 %v1611, %v1609
    %v1646 = vpack.c.b16 %v1614, %v1612
    %v1647 = vpack.c.b16 %v1615, %v1613
    %1680 = vmatprep.subr.bf16.mxu0 %v1617
    %1681 = vmatpush1.bf16.msra.mxu0 %v1616
    %1682 = vmatprep.subr.bf16.mxu0 %v1619
    %1683 = vmatpush1.bf16.msra.mxu0 %v1618
    %1684 = vmatprep.subr.bf16.mxu0 %v1621
    %1685 = vmatpush1.bf16.msra.mxu0 %v1620
    %1686 = vmatprep.subr.bf16.mxu0 %v1623
    %1687 = vmatpush1.bf16.msra.mxu0 %v1622
    %1688 = vmatprep.subr.bf16.mxu0 %v1625
    %1689 = vmatpush1.bf16.msra.mxu0 %v1624
    %1690 = vmatprep.subr.bf16.mxu0 %v1627
    %1691 = vmatpush1.bf16.msra.mxu0 %v1626
    %1692 = vmatprep.subr.bf16.mxu0 %v1629
    %1693 = vmatpush1.bf16.msra.mxu0 %v1628
    %1694 = vmatprep.subr.bf16.mxu0 %v1631
    %1695 = vmatpush1.bf16.msra.mxu0 %v1630
    %1696 = vmatprep.subr.bf16.mxu0 %v1633
    %1697 = vmatpush1.bf16.msra.mxu0 %v1632
    %1698 = vmatprep.subr.bf16.mxu0 %v1635
    %1699 = vmatpush1.bf16.msra.mxu0 %v1634
    %1700 = vmatprep.subr.bf16.mxu0 %v1637
    %1701 = vmatpush1.bf16.msra.mxu0 %v1636
    %1702 = vmatprep.subr.bf16.mxu0 %v1639
    %1703 = vmatpush1.bf16.msra.mxu0 %v1638
    %1704 = vmatprep.subr.bf16.mxu0 %v1641
    %1705 = vmatpush1.bf16.msra.mxu0 %v1640
    %1706 = vmatprep.subr.bf16.mxu0 %v1643
    %1707 = vmatpush1.bf16.msra.mxu0 %v1642
    %1708 = vmatprep.subr.bf16.mxu0 %v1645
    %1709 = vmatpush1.bf16.msra.mxu0 %v1644
    %1710 = vmatprep.subr.bf16.mxu0 %v1647
    %1711 = vmatpush1.bf16.msra.mxu0 %v1646
    %1712 = vmatprep.mubr.bf16.mxu0 %v1493
    %1713 = vmatmul.mubr.bf16.gmra.mrb[0].mxu0 %v1490
    %v1714 = vpop.f32.mrb[0].mxu0
    %v1715 = vadd.f32 0.0, %v1714
    %v1716 = vpop.f32.mrb[0].mxu0
    %v1717 = vadd.f32 0.0, %v1716
    %v1718 = vpop.f32.mrb[0].mxu0
    %v1719 = vadd.f32 0.0, %v1718
    %v1720 = vpop.f32.mrb[0].mxu0
    %v1721 = vadd.f32 0.0, %v1720
    %1722 = vmatprep.mubr.bf16.mxu0 %v1497
    %1723 = vmatmul.mubr.bf16.gmra.mrb[0].mxu0 %v1495
    %v1724 = vpop.f32.mrb[0].mxu0
    %v1725 = vadd.f32 0.0, %v1724
    %v1726 = vpop.f32.mrb[0].mxu0
    %v1727 = vadd.f32 0.0, %v1726
    %v1728 = vpop.f32.mrb[0].mxu0
    %v1729 = vadd.f32 0.0, %v1728
    %v1730 = vpop.f32.mrb[0].mxu0
    %v1731 = vadd.f32 0.0, %v1730
    %1732 = vmatprep.mubr.bf16.mxu0 %v1501
    %1733 = vmatmul.mubr.bf16.gmra.mrb[0].mxu0 %v1499
    %v1734 = vpop.f32.mrb[0].mxu0
    %v1735 = vadd.f32 0.0, %v1734
    %v1736 = vpop.f32.mrb[0].mxu0
    %v1737 = vadd.f32 0.0, %v1736
    %v1738 = vpop.f32.mrb[0].mxu0
    %v1739 = vadd.f32 0.0, %v1738
    %v1740 = vpop.f32.mrb[0].mxu0
    %v1741 = vadd.f32 0.0, %v1740
    %1742 = vmatprep.mubr.bf16.mxu0 %v1505
    %1743 = vmatmul.mubr.bf16.gmra.mrb[0].mxu0 %v1503
    %v1744 = vpop.f32.mrb[0].mxu0
    %v1745 = vadd.f32 0.0, %v1744
    %v1746 = vpop.f32.mrb[0].mxu0
    %v1747 = vadd.f32 0.0, %v1746
    %v1748 = vpop.f32.mrb[0].mxu0
    %v1749 = vadd.f32 0.0, %v1748
    %v1750 = vpop.f32.mrb[0].mxu0
    %v1751 = vadd.f32 0.0, %v1750
    %1752 = vmatprep.mubr.bf16.mxu0 %v1509
    %1753 = vmatmul.mubr.bf16.gmra.mrb[0].mxu0 %v1507
    %v1754 = vpop.f32.mrb[0].mxu0
    %v1755 = vadd.f32 0.0, %v1754
    %v1756 = vpop.f32.mrb[0].mxu0
    %v1757 = vadd.f32 0.0, %v1756
    %v1758 = vpop.f32.mrb[0].mxu0
    %v1759 = vadd.f32 0.0, %v1758
    %v1760 = vpop.f32.mrb[0].mxu0
    %v1761 = vadd.f32 0.0, %v1760
    %1762 = vdwg.mxu0
    %vm1763 = vsmask.f32 4352
    %v1765 = vshrl.u32 %v1397, 16
    %v1767 = vrot.slane %v1765, 3
    %v1768 = vshll.u32 %v1397, 16
    %v1770 = vrot.slane %v1768, 4
    %v1771 = vor.u32 %v1767, %v1770
    %v1773 = vshrl.u32 %v1399, 16
    %v1775 = vrot.slane %v1773, 3
    %v1776 = vshll.u32 %v1399, 16
    %v1778 = vrot.slane %v1776, 4
    %v1779 = vor.u32 %v1775, %v1778
    %v1780 = vsel %vm1763, %v1771, %v1779
    %v1782 = vshrl.u32 %v1398, 16
    %v1784 = vrot.slane %v1782, 3
    %v1785 = vshll.u32 %v1398, 16
    %v1787 = vrot.slane %v1785, 4
    %v1788 = vor.u32 %v1784, %v1787
    %v1790 = vshrl.u32 %v1400, 16
    %v1792 = vrot.slane %v1790, 3
    %v1793 = vshll.u32 %v1400, 16
    %v1795 = vrot.slane %v1793, 4
    %v1796 = vor.u32 %v1792, %v1795
    %v1797 = vsel %vm1763, %v1788, %v1796
    %v1799 = vshrl.u32 %v1401, 16
    %v1801 = vrot.slane %v1799, 3
    %v1802 = vshll.u32 %v1401, 16
    %v1804 = vrot.slane %v1802, 4
    %v1805 = vor.u32 %v1801, %v1804
    %v1806 = vsel %vm1763, %v1779, %v1805
    %v1808 = vshrl.u32 %v1402, 16
    %v1810 = vrot.slane %v1808, 3
    %v1811 = vshll.u32 %v1402, 16
    %v1813 = vrot.slane %v1811, 4
    %v1814 = vor.u32 %v1810, %v1813
    %v1815 = vsel %vm1763, %v1796, %v1814
    %v1817 = vshrl.u32 %v1403, 16
    %v1819 = vrot.slane %v1817, 3
    %v1820 = vshll.u32 %v1403, 16
    %v1822 = vrot.slane %v1820, 4
    %v1823 = vor.u32 %v1819, %v1822
    %v1824 = vsel %vm1763, %v1805, %v1823
    %v1826 = vshrl.u32 %v1404, 16
    %v1828 = vrot.slane %v1826, 3
    %v1829 = vshll.u32 %v1404, 16
    %v1831 = vrot.slane %v1829, 4
    %v1832 = vor.u32 %v1828, %v1831
    %v1833 = vsel %vm1763, %v1814, %v1832
    %v1835 = vshrl.u32 %v1405, 16
    %v1837 = vrot.slane %v1835, 3
    %v1838 = vshll.u32 %v1405, 16
    %v1840 = vrot.slane %v1838, 4
    %v1841 = vor.u32 %v1837, %v1840
    %v1842 = vsel %vm1763, %v1823, %v1841
    %v1844 = vshrl.u32 %v1406, 16
    %v1846 = vrot.slane %v1844, 3
    %v1847 = vshll.u32 %v1406, 16
    %v1849 = vrot.slane %v1847, 4
    %v1850 = vor.u32 %v1846, %v1849
    %v1851 = vsel %vm1763, %v1832, %v1850
    %v1853 = vshrl.u32 %v1407, 16
    %v1855 = vrot.slane %v1853, 3
    %v1856 = vshll.u32 %v1407, 16
    %v1858 = vrot.slane %v1856, 4
    %v1859 = vor.u32 %v1855, %v1858
    %v1860 = vsel %vm1763, %v1841, %v1859
    %v1862 = vshrl.u32 %v1408, 16
    %v1864 = vrot.slane %v1862, 3
    %v1865 = vshll.u32 %v1408, 16
    %v1867 = vrot.slane %v1865, 4
    %v1868 = vor.u32 %v1864, %v1867
    %v1869 = vsel %vm1763, %v1850, %v1868
    %v1912 = vunpack.c.l.b16 %v1409
    %v1913 = vunpack.c.h.b16 %v1409
    %v1914 = vunpack.c.l.b16 %v1410
    %v1915 = vunpack.c.h.b16 %v1410
    %v1916 = vunpack.c.l.b16 %v1411
    %v1917 = vunpack.c.h.b16 %v1411
    %v1918 = vunpack.c.l.b16 %v1412
    %v1919 = vunpack.c.h.b16 %v1412
    %v1920 = vunpack.c.l.b16 %v1413
    %v1921 = vunpack.c.h.b16 %v1413
    %v1922 = vunpack.c.l.b16 %v1414
    %v1923 = vunpack.c.h.b16 %v1414
    %v1924 = vunpack.c.l.b16 %v1415
    %v1925 = vunpack.c.h.b16 %v1415
    %v1926 = vunpack.c.l.b16 %v1416
    %v1927 = vunpack.c.h.b16 %v1416
    %v1928 = vunpack.c.l.b16 %v1417
    %v1929 = vunpack.c.h.b16 %v1417
    %v1930 = vunpack.c.l.b16 %v1418
    %v1931 = vunpack.c.h.b16 %v1418
    %v1932 = vunpack.c.l.b16 %v1419
    %v1933 = vunpack.c.h.b16 %v1419
    %v1934 = vunpack.c.l.b16 %v1420
    %v1935 = vunpack.c.h.b16 %v1420
    %v1936 = vunpack.c.l.b16 %v1421
    %v1937 = vunpack.c.h.b16 %v1421
    %v1938 = vunpack.c.l.b16 %v1422
    %v1939 = vunpack.c.h.b16 %v1422
    %v1940 = vunpack.c.l.b16 %v1423
    %v1941 = vunpack.c.h.b16 %v1423
    %v1942 = vunpack.c.l.b16 %v1424
    %v1943 = vunpack.c.h.b16 %v1424
    %v1944 = vunpack.c.l.b16 %v1425
    %v1945 = vunpack.c.h.b16 %v1425
    %v1946 = vunpack.c.l.b16 %v1426
    %v1947 = vunpack.c.h.b16 %v1426
    %v1948 = vunpack.c.l.b16 %v1427
    %v1949 = vunpack.c.h.b16 %v1427
    %v1950 = vunpack.c.l.b16 %v1428
    %v1951 = vunpack.c.h.b16 %v1428
    %v1952 = vunpack.c.l.b16 %v1429
    %v1953 = vunpack.c.h.b16 %v1429
    %v1954 = vunpack.c.l.b16 %v1430
    %v1955 = vunpack.c.h.b16 %v1430
    %v1956 = vunpack.c.l.b16 %v1431
    %v1957 = vunpack.c.h.b16 %v1431
    %v1958 = vunpack.c.l.b16 %v1432
    %v1959 = vunpack.c.h.b16 %v1432
    %v1960 = vunpack.c.l.b16 %v1433
    %v1961 = vunpack.c.h.b16 %v1433
    %v1962 = vunpack.c.l.b16 %v1434
    %v1963 = vunpack.c.h.b16 %v1434
    %v1964 = vunpack.c.l.b16 %v1435
    %v1965 = vunpack.c.h.b16 %v1435
    %v1966 = vunpack.c.l.b16 %v1436
    %v1967 = vunpack.c.h.b16 %v1436
    %v1968 = vunpack.c.l.b16 %v1437
    %v1969 = vunpack.c.h.b16 %v1437
    %v1970 = vunpack.c.l.b16 %v1438
    %v1971 = vunpack.c.h.b16 %v1438
    %v1972 = vunpack.c.l.b16 %v1439
    %v1973 = vunpack.c.h.b16 %v1439
    %v1974 = vunpack.c.l.b16 %v1440
    %v1975 = vunpack.c.h.b16 %v1440
    %v1976 = vpack.c.b16 %v1914, %v1912
    %v1977 = vpack.c.b16 %v1915, %v1913
    %v1978 = vpack.c.b16 %v1918, %v1916
    %v1979 = vpack.c.b16 %v1919, %v1917
    %v1980 = vpack.c.b16 %v1922, %v1920
    %v1981 = vpack.c.b16 %v1923, %v1921
    %v1982 = vpack.c.b16 %v1926, %v1924
    %v1983 = vpack.c.b16 %v1927, %v1925
    %v1984 = vpack.c.b16 %v1930, %v1928
    %v1985 = vpack.c.b16 %v1931, %v1929
    %v1986 = vpack.c.b16 %v1934, %v1932
    %v1987 = vpack.c.b16 %v1935, %v1933
    %v1988 = vpack.c.b16 %v1938, %v1936
    %v1989 = vpack.c.b16 %v1939, %v1937
    %v1990 = vpack.c.b16 %v1942, %v1940
    %v1991 = vpack.c.b16 %v1943, %v1941
    %v1992 = vpack.c.b16 %v1946, %v1944
    %v1993 = vpack.c.b16 %v1947, %v1945
    %v1994 = vpack.c.b16 %v1950, %v1948
    %v1995 = vpack.c.b16 %v1951, %v1949
    %v1996 = vpack.c.b16 %v1954, %v1952
    %v1997 = vpack.c.b16 %v1955, %v1953
    %v1998 = vpack.c.b16 %v1958, %v1956
    %v1999 = vpack.c.b16 %v1959, %v1957
    %v2000 = vpack.c.b16 %v1962, %v1960
    %v2001 = vpack.c.b16 %v1963, %v1961
    %v2002 = vpack.c.b16 %v1966, %v1964
    %v2003 = vpack.c.b16 %v1967, %v1965
    %v2004 = vpack.c.b16 %v1970, %v1968
    %v2005 = vpack.c.b16 %v1971, %v1969
    %v2006 = vpack.c.b16 %v1974, %v1972
    %v2007 = vpack.c.b16 %v1975, %v1973
    %2040 = vmatprep.subr.bf16.mxu0 %v1977
    %2041 = vmatpush1.bf16.msra.mxu0 %v1976
    %2042 = vmatprep.subr.bf16.mxu0 %v1979
    %2043 = vmatpush1.bf16.msra.mxu0 %v1978
    %2044 = vmatprep.subr.bf16.mxu0 %v1981
    %2045 = vmatpush1.bf16.msra.mxu0 %v1980
    %2046 = vmatprep.subr.bf16.mxu0 %v1983
    %2047 = vmatpush1.bf16.msra.mxu0 %v1982
    %2048 = vmatprep.subr.bf16.mxu0 %v1985
    %2049 = vmatpush1.bf16.msra.mxu0 %v1984
    %2050 = vmatprep.subr.bf16.mxu0 %v1987
    %2051 = vmatpush1.bf16.msra.mxu0 %v1986
    %2052 = vmatprep.subr.bf16.mxu0 %v1989
    %2053 = vmatpush1.bf16.msra.mxu0 %v1988
    %2054 = vmatprep.subr.bf16.mxu0 %v1991
    %2055 = vmatpush1.bf16.msra.mxu0 %v1990
    %2056 = vmatprep.subr.bf16.mxu0 %v1993
    %2057 = vmatpush1.bf16.msra.mxu0 %v1992
    %2058 = vmatprep.subr.bf16.mxu0 %v1995
    %2059 = vmatpush1.bf16.msra.mxu0 %v1994
    %2060 = vmatprep.subr.bf16.mxu0 %v1997
    %2061 = vmatpush1.bf16.msra.mxu0 %v1996
    %2062 = vmatprep.subr.bf16.mxu0 %v1999
    %2063 = vmatpush1.bf16.msra.mxu0 %v1998
    %2064 = vmatprep.subr.bf16.mxu0 %v2001
    %2065 = vmatpush1.bf16.msra.mxu0 %v2000
    %2066 = vmatprep.subr.bf16.mxu0 %v2003
    %2067 = vmatpush1.bf16.msra.mxu0 %v2002
    %2068 = vmatprep.subr.bf16.mxu0 %v2005
    %2069 = vmatpush1.bf16.msra.mxu0 %v2004
    %2070 = vmatprep.subr.bf16.mxu0 %v2007
    %2071 = vmatpush1.bf16.msra.mxu0 %v2006
    %2072 = vmatprep.mubr.bf16.mxu0 %v1797
    %2073 = vmatmul.mubr.bf16.gmra.mrb[0].mxu0 %v1780
    %v2074 = vpop.f32.mrb[0].mxu0
    %v2075 = vadd.f32 %v1715, %v2074
    %v2076 = vpop.f32.mrb[0].mxu0
    %v2077 = vadd.f32 %v1717, %v2076
    %v2078 = vpop.f32.mrb[0].mxu0
    %v2079 = vadd.f32 %v1719, %v2078
    %v2080 = vpop.f32.mrb[0].mxu0
    %v2081 = vadd.f32 %v1721, %v2080
    %2082 = vmatprep.mubr.bf16.mxu0 %v1815
    %2083 = vmatmul.mubr.bf16.gmra.mrb[0].mxu0 %v1806
    %v2084 = vpop.f32.mrb[0].mxu0
    %v2085 = vadd.f32 %v1725, %v2084
    %v2086 = vpop.f32.mrb[0].mxu0
    %v2087 = vadd.f32 %v1727, %v2086
    %v2088 = vpop.f32.mrb[0].mxu0
    %v2089 = vadd.f32 %v1729, %v2088
    %v2090 = vpop.f32.mrb[0].mxu0
    %v2091 = vadd.f32 %v1731, %v2090
    %2092 = vmatprep.mubr.bf16.mxu0 %v1833
    %2093 = vmatmul.mubr.bf16.gmra.mrb[0].mxu0 %v1824
    %v2094 = vpop.f32.mrb[0].mxu0
    %v2095 = vadd.f32 %v1735, %v2094
    %v2096 = vpop.f32.mrb[0].mxu0
    %v2097 = vadd.f32 %v1737, %v2096
    %v2098 = vpop.f32.mrb[0].mxu0
    %v2099 = vadd.f32 %v1739, %v2098
    %v2100 = vpop.f32.mrb[0].mxu0
    %v2101 = vadd.f32 %v1741, %v2100
    %2102 = vmatprep.mubr.bf16.mxu0 %v1851
    %2103 = vmatmul.mubr.bf16.gmra.mrb[0].mxu0 %v1842
    %v2104 = vpop.f32.mrb[0].mxu0
    %v2105 = vadd.f32 %v1745, %v2104
    %v2106 = vpop.f32.mrb[0].mxu0
    %v2107 = vadd.f32 %v1747, %v2106
    %v2108 = vpop.f32.mrb[0].mxu0
    %v2109 = vadd.f32 %v1749, %v2108
    %v2110 = vpop.f32.mrb[0].mxu0
    %v2111 = vadd.f32 %v1751, %v2110
    %2112 = vmatprep.mubr.bf16.mxu0 %v1869
    %2113 = vmatmul.mubr.bf16.gmra.mrb[0].mxu0 %v1860
    %v2114 = vpop.f32.mrb[0].mxu0
    %v2115 = vadd.f32 %v1755, %v2114
    %v2116 = vpop.f32.mrb[0].mxu0
    %v2117 = vadd.f32 %v1757, %v2116
    %v2118 = vpop.f32.mrb[0].mxu0
    %v2119 = vadd.f32 %v1759, %v2118
    %v2120 = vpop.f32.mrb[0].mxu0
    %v2121 = vadd.f32 %v1761, %v2120
    %2122 = vdwg.mxu0
    %v2123 = vld [vmem:[#allocation3 + $0x50] sm:$0x1f]
    %v2124 = vld [vmem:[#allocation3 + $0x58] sm:$0x1f]
    %s2125 = scalar_lea.vmem [#allocation7], 512
    %v2126 = vld [vmem:[%s2125] sm:$0xff]
    %v2127 = vld [vmem:[%s2125 + $0x8] sm:$0xff]
    %v2128 = vld [vmem:[%s2125 + $0x10] sm:$0xff]
    %v2129 = vld [vmem:[%s2125 + $0x18] sm:$0xff]
    %v2130 = vld [vmem:[%s2125 + $0x20] sm:$0xff]
    %v2131 = vld [vmem:[%s2125 + $0x28] sm:$0xff]
    %v2132 = vld [vmem:[%s2125 + $0x30] sm:$0xff]
    %v2133 = vld [vmem:[%s2125 + $0x38] sm:$0xff]
    %v2134 = vld [vmem:[%s2125 + $0x40] sm:$0xff]
    %v2135 = vld [vmem:[%s2125 + $0x48] sm:$0xff]
    %v2136 = vld [vmem:[%s2125 + $0x50] sm:$0xff]
    %v2137 = vld [vmem:[%s2125 + $0x58] sm:$0xff]
    %v2138 = vld [vmem:[%s2125 + $0x60] sm:$0xff]
    %v2139 = vld [vmem:[%s2125 + $0x68] sm:$0xff]
    %v2140 = vld [vmem:[%s2125 + $0x70] sm:$0xff]
    %v2141 = vld [vmem:[%s2125 + $0x78] sm:$0xff]
    %v2142 = vld [vmem:[%s2125 + $0x80] sm:$0xff]
    %v2143 = vld [vmem:[%s2125 + $0x88] sm:$0xff]
    %v2144 = vld [vmem:[%s2125 + $0x90] sm:$0xff]
    %v2145 = vld [vmem:[%s2125 + $0x98] sm:$0xff]
    %v2146 = vld [vmem:[%s2125 + $0xa0] sm:$0xff]
    %v2147 = vld [vmem:[%s2125 + $0xa8] sm:$0xff]
    %v2148 = vld [vmem:[%s2125 + $0xb0] sm:$0xff]
    %v2149 = vld [vmem:[%s2125 + $0xb8] sm:$0xff]
    %v2150 = vld [vmem:[%s2125 + $0xc0] sm:$0xff]
    %v2151 = vld [vmem:[%s2125 + $0xc8] sm:$0xff]
    %v2152 = vld [vmem:[%s2125 + $0xd0] sm:$0xff]
    %v2153 = vld [vmem:[%s2125 + $0xd8] sm:$0xff]
    %v2154 = vld [vmem:[%s2125 + $0xe0] sm:$0xff]
    %v2155 = vld [vmem:[%s2125 + $0xe8] sm:$0xff]
    %v2156 = vld [vmem:[%s2125 + $0xf0] sm:$0xff]
    %v2157 = vld [vmem:[%s2125 + $0xf8] sm:$0xff]
    %vm2158 = vsmask.f32 3328
    %v2160 = vshrl.u32 %v1441, 16
    %v2162 = vrot.slane %v2160, 4
    %v2163 = vshll.u32 %v1441, 16
    %v2165 = vrot.slane %v2163, 5
    %v2166 = vor.u32 %v2162, %v2165
    %v2167 = vrot.slane %v1773, 4
    %v2168 = vrot.slane %v1776, 5
    %v2169 = vor.u32 %v2167, %v2168
    %v2170 = vsel %vm2158, %v2166, %v2169
    %v2172 = vshrl.u32 %v1442, 16
    %v2174 = vrot.slane %v2172, 4
    %v2175 = vshll.u32 %v1442, 16
    %v2177 = vrot.slane %v2175, 5
    %v2178 = vor.u32 %v2174, %v2177
    %v2179 = vrot.slane %v1790, 4
    %v2180 = vrot.slane %v1793, 5
    %v2181 = vor.u32 %v2179, %v2180
    %v2182 = vsel %vm2158, %v2178, %v2181
    %v2183 = vrot.slane %v1799, 4
    %v2184 = vrot.slane %v1802, 5
    %v2185 = vor.u32 %v2183, %v2184
    %v2186 = vsel %vm2158, %v2169, %v2185
    %v2187 = vrot.slane %v1808, 4
    %v2188 = vrot.slane %v1811, 5
    %v2189 = vor.u32 %v2187, %v2188
    %v2190 = vsel %vm2158, %v2181, %v2189
    %v2191 = vrot.slane %v1817, 4
    %v2192 = vrot.slane %v1820, 5
    %v2193 = vor.u32 %v2191, %v2192
    %v2194 = vsel %vm2158, %v2185, %v2193
    %v2195 = vrot.slane %v1826, 4
    %v2196 = vrot.slane %v1829, 5
    %v2197 = vor.u32 %v2195, %v2196
    %v2198 = vsel %vm2158, %v2189, %v2197
    %v2199 = vrot.slane %v1835, 4
    %v2200 = vrot.slane %v1838, 5
    %v2201 = vor.u32 %v2199, %v2200
    %v2202 = vsel %vm2158, %v2193, %v2201
    %v2203 = vrot.slane %v1844, 4
    %v2204 = vrot.slane %v1847, 5
    %v2205 = vor.u32 %v2203, %v2204
    %v2206 = vsel %vm2158, %v2197, %v2205
    %v2208 = vshrl.u32 %v2123, 16
    %v2210 = vrot.slane %v2208, 4
    %v2211 = vshll.u32 %v2123, 16
    %v2213 = vrot.slane %v2211, 5
    %v2214 = vor.u32 %v2210, %v2213
    %v2215 = vsel %vm2158, %v2201, %v2214
    %v2217 = vshrl.u32 %v2124, 16
    %v2219 = vrot.slane %v2217, 4
    %v2220 = vshll.u32 %v2124, 16
    %v2222 = vrot.slane %v2220, 5
    %v2223 = vor.u32 %v2219, %v2222
    %v2224 = vsel %vm2158, %v2205, %v2223
    %v2267 = vunpack.c.l.b16 %v2126
    %v2268 = vunpack.c.h.b16 %v2126
    %v2269 = vunpack.c.l.b16 %v2127
    %v2270 = vunpack.c.h.b16 %v2127
    %v2271 = vunpack.c.l.b16 %v2128
    %v2272 = vunpack.c.h.b16 %v2128
    %v2273 = vunpack.c.l.b16 %v2129
    %v2274 = vunpack.c.h.b16 %v2129
    %v2275 = vunpack.c.l.b16 %v2130
    %v2276 = vunpack.c.h.b16 %v2130
    %v2277 = vunpack.c.l.b16 %v2131
    %v2278 = vunpack.c.h.b16 %v2131
    %v2279 = vunpack.c.l.b16 %v2132
    %v2280 = vunpack.c.h.b16 %v2132
    %v2281 = vunpack.c.l.b16 %v2133
    %v2282 = vunpack.c.h.b16 %v2133
    %v2283 = vunpack.c.l.b16 %v2134
    %v2284 = vunpack.c.h.b16 %v2134
    %v2285 = vunpack.c.l.b16 %v2135
    %v2286 = vunpack.c.h.b16 %v2135
    %v2287 = vunpack.c.l.b16 %v2136
    %v2288 = vunpack.c.h.b16 %v2136
    %v2289 = vunpack.c.l.b16 %v2137
    %v2290 = vunpack.c.h.b16 %v2137
    %v2291 = vunpack.c.l.b16 %v2138
    %v2292 = vunpack.c.h.b16 %v2138
    %v2293 = vunpack.c.l.b16 %v2139
    %v2294 = vunpack.c.h.b16 %v2139
    %v2295 = vunpack.c.l.b16 %v2140
    %v2296 = vunpack.c.h.b16 %v2140
    %v2297 = vunpack.c.l.b16 %v2141
    %v2298 = vunpack.c.h.b16 %v2141
    %v2299 = vunpack.c.l.b16 %v2142
    %v2300 = vunpack.c.h.b16 %v2142
    %v2301 = vunpack.c.l.b16 %v2143
    %v2302 = vunpack.c.h.b16 %v2143
    %v2303 = vunpack.c.l.b16 %v2144
    %v2304 = vunpack.c.h.b16 %v2144
    %v2305 = vunpack.c.l.b16 %v2145
    %v2306 = vunpack.c.h.b16 %v2145
    %v2307 = vunpack.c.l.b16 %v2146
    %v2308 = vunpack.c.h.b16 %v2146
    %v2309 = vunpack.c.l.b16 %v2147
    %v2310 = vunpack.c.h.b16 %v2147
    %v2311 = vunpack.c.l.b16 %v2148
    %v2312 = vunpack.c.h.b16 %v2148
    %v2313 = vunpack.c.l.b16 %v2149
    %v2314 = vunpack.c.h.b16 %v2149
    %v2315 = vunpack.c.l.b16 %v2150
    %v2316 = vunpack.c.h.b16 %v2150
    %v2317 = vunpack.c.l.b16 %v2151
    %v2318 = vunpack.c.h.b16 %v2151
    %v2319 = vunpack.c.l.b16 %v2152
    %v2320 = vunpack.c.h.b16 %v2152
    %v2321 = vunpack.c.l.b16 %v2153
    %v2322 = vunpack.c.h.b16 %v2153
    %v2323 = vunpack.c.l.b16 %v2154
    %v2324 = vunpack.c.h.b16 %v2154
    %v2325 = vunpack.c.l.b16 %v2155
    %v2326 = vunpack.c.h.b16 %v2155
    %v2327 = vunpack.c.l.b16 %v2156
    %v2328 = vunpack.c.h.b16 %v2156
    %v2329 = vunpack.c.l.b16 %v2157
    %v2330 = vunpack.c.h.b16 %v2157
    %v2331 = vpack.c.b16 %v2269, %v2267
    %v2332 = vpack.c.b16 %v2270, %v2268
    %v2333 = vpack.c.b16 %v2273, %v2271
    %v2334 = vpack.c.b16 %v2274, %v2272
    %v2335 = vpack.c.b16 %v2277, %v2275
    %v2336 = vpack.c.b16 %v2278, %v2276
    %v2337 = vpack.c.b16 %v2281, %v2279
    %v2338 = vpack.c.b16 %v2282, %v2280
    %v2339 = vpack.c.b16 %v2285, %v2283
    %v2340 = vpack.c.b16 %v2286, %v2284
    %v2341 = vpack.c.b16 %v2289, %v2287
    %v2342 = vpack.c.b16 %v2290, %v2288
    %v2343 = vpack.c.b16 %v2293, %v2291
    %v2344 = vpack.c.b16 %v2294, %v2292
    %v2345 = vpack.c.b16 %v2297, %v2295
    %v2346 = vpack.c.b16 %v2298, %v2296
    %v2347 = vpack.c.b16 %v2301, %v2299
    %v2348 = vpack.c.b16 %v2302, %v2300
    %v2349 = vpack.c.b16 %v2305, %v2303
    %v2350 = vpack.c.b16 %v2306, %v2304
    %v2351 = vpack.c.b16 %v2309, %v2307
    %v2352 = vpack.c.b16 %v2310, %v2308
    %v2353 = vpack.c.b16 %v2313, %v2311
    %v2354 = vpack.c.b16 %v2314, %v2312
    %v2355 = vpack.c.b16 %v2317, %v2315
    %v2356 = vpack.c.b16 %v2318, %v2316
    %v2357 = vpack.c.b16 %v2321, %v2319
    %v2358 = vpack.c.b16 %v2322, %v2320
    %v2359 = vpack.c.b16 %v2325, %v2323
    %v2360 = vpack.c.b16 %v2326, %v2324
    %v2361 = vpack.c.b16 %v2329, %v2327
    %v2362 = vpack.c.b16 %v2330, %v2328
    %2395 = vmatprep.subr.bf16.mxu0 %v2332
    %2396 = vmatpush1.bf16.msra.mxu0 %v2331
    %2397 = vmatprep.subr.bf16.mxu0 %v2334
    %2398 = vmatpush1.bf16.msra.mxu0 %v2333
    %2399 = vmatprep.subr.bf16.mxu0 %v2336
    %2400 = vmatpush1.bf16.msra.mxu0 %v2335
    %2401 = vmatprep.subr.bf16.mxu0 %v2338
    %2402 = vmatpush1.bf16.msra.mxu0 %v2337
    %2403 = vmatprep.subr.bf16.mxu0 %v2340
    %2404 = vmatpush1.bf16.msra.mxu0 %v2339
    %2405 = vmatprep.subr.bf16.mxu0 %v2342
    %2406 = vmatpush1.bf16.msra.mxu0 %v2341
    %2407 = vmatprep.subr.bf16.mxu0 %v2344
    %2408 = vmatpush1.bf16.msra.mxu0 %v2343
    %2409 = vmatprep.subr.bf16.mxu0 %v2346
    %2410 = vmatpush1.bf16.msra.mxu0 %v2345
    %2411 = vmatprep.subr.bf16.mxu0 %v2348
    %2412 = vmatpush1.bf16.msra.mxu0 %v2347
    %2413 = vmatprep.subr.bf16.mxu0 %v2350
    %2414 = vmatpush1.bf16.msra.mxu0 %v2349
    %2415 = vmatprep.subr.bf16.mxu0 %v2352
    %2416 = vmatpush1.bf16.msra.mxu0 %v2351
    %2417 = vmatprep.subr.bf16.mxu0 %v2354
    %2418 = vmatpush1.bf16.msra.mxu0 %v2353
    %2419 = vmatprep.subr.bf16.mxu0 %v2356
    %2420 = vmatpush1.bf16.msra.mxu0 %v2355
    %2421 = vmatprep.subr.bf16.mxu0 %v2358
    %2422 = vmatpush1.bf16.msra.mxu0 %v2357
    %2423 = vmatprep.subr.bf16.mxu0 %v2360
    %2424 = vmatpush1.bf16.msra.mxu0 %v2359
    %2425 = vmatprep.subr.bf16.mxu0 %v2362
    %2426 = vmatpush1.bf16.msra.mxu0 %v2361
    %2427 = vmatprep.mubr.bf16.mxu0 %v2182
    %2428 = vmatmul.mubr.bf16.gmra.mrb[0].mxu0 %v2170
    %v2429 = vpop.f32.mrb[0].mxu0
    %v2430 = vadd.f32 0.0, %v2429
    %v2431 = vpop.f32.mrb[0].mxu0
    %v2432 = vadd.f32 0.0, %v2431
    %v2433 = vpop.f32.mrb[0].mxu0
    %v2434 = vadd.f32 0.0, %v2433
    %v2435 = vpop.f32.mrb[0].mxu0
    %v2436 = vadd.f32 0.0, %v2435
    %2437 = vmatprep.mubr.bf16.mxu0 %v2190
    %2438 = vmatmul.mubr.bf16.gmra.mrb[0].mxu0 %v2186
    %v2439 = vpop.f32.mrb[0].mxu0
    %v2440 = vadd.f32 0.0, %v2439
    %v2441 = vpop.f32.mrb[0].mxu0
    %v2442 = vadd.f32 0.0, %v2441
    %v2443 = vpop.f32.mrb[0].mxu0
    %v2444 = vadd.f32 0.0, %v2443
    %v2445 = vpop.f32.mrb[0].mxu0
    %v2446 = vadd.f32 0.0, %v2445
    %2447 = vmatprep.mubr.bf16.mxu0 %v2198
    %2448 = vmatmul.mubr.bf16.gmra.mrb[0].mxu0 %v2194
    %v2449 = vpop.f32.mrb[0].mxu0
    %v2450 = vadd.f32 0.0, %v2449
    %v2451 = vpop.f32.mrb[0].mxu0
    %v2452 = vadd.f32 0.0, %v2451
    %v2453 = vpop.f32.mrb[0].mxu0
    %v2454 = vadd.f32 0.0, %v2453
    %v2455 = vpop.f32.mrb[0].mxu0
    %v2456 = vadd.f32 0.0, %v2455
    %2457 = vmatprep.mubr.bf16.mxu0 %v2206
    %2458 = vmatmul.mubr.bf16.gmra.mrb[0].mxu0 %v2202
    %v2459 = vpop.f32.mrb[0].mxu0
    %v2460 = vadd.f32 0.0, %v2459
    %v2461 = vpop.f32.mrb[0].mxu0
    %v2462 = vadd.f32 0.0, %v2461
    %v2463 = vpop.f32.mrb[0].mxu0
    %v2464 = vadd.f32 0.0, %v2463
    %v2465 = vpop.f32.mrb[0].mxu0
    %v2466 = vadd.f32 0.0, %v2465
    %2467 = vmatprep.mubr.bf16.mxu0 %v2224
    %2468 = vmatmul.mubr.bf16.gmra.mrb[0].mxu0 %v2215
    %v2469 = vpop.f32.mrb[0].mxu0
    %v2470 = vadd.f32 0.0, %v2469
    %v2471 = vpop.f32.mrb[0].mxu0
    %v2472 = vadd.f32 0.0, %v2471
    %v2473 = vpop.f32.mrb[0].mxu0
    %v2474 = vadd.f32 0.0, %v2473
    %v2475 = vpop.f32.mrb[0].mxu0
    %v2476 = vadd.f32 0.0, %v2475
    %2477 = vdwg.mxu0
    %v2478 = vadd.f32 %v2075, %v2430
    %v2479 = vadd.f32 %v2077, %v2432
    %v2480 = vadd.f32 %v2079, %v2434
    %v2481 = vadd.f32 %v2081, %v2436
    %v2482 = vadd.f32 %v2085, %v2440
    %v2483 = vadd.f32 %v2087, %v2442
    %v2484 = vadd.f32 %v2089, %v2444
    %v2485 = vadd.f32 %v2091, %v2446
    %v2486 = vadd.f32 %v2095, %v2450
    %v2487 = vadd.f32 %v2097, %v2452
    %v2488 = vadd.f32 %v2099, %v2454
    %v2489 = vadd.f32 %v2101, %v2456
    %v2490 = vadd.f32 %v2105, %v2460
    %v2491 = vadd.f32 %v2107, %v2462
    %v2492 = vadd.f32 %v2109, %v2464
    %v2493 = vadd.f32 %v2111, %v2466
    %v2494 = vadd.f32 %v2115, %v2470
    %v2495 = vadd.f32 %v2117, %v2472
    %v2496 = vadd.f32 %v2119, %v2474
    %v2497 = vadd.f32 %v2121, %v2476
    %v2498 = vld [vmem:[%s8] sm:$0x3]
    %v2500 = vlaneseq
    %v2501 = vshrl.u32 %v2500, 7
    %v2502 = vsub.s32 0, %v2501
    %v2503 = vrot.slane %v2498, %v2502
    %v2504 = vlaneseq
    %v2505 = vshrl.u32 %v2504, 7
    %v2506 = vsub.s32 1, %v2505
    %v2507 = vrot.slane %v2498, %v2506
    %v2510 = vadd.f32 %v2478, %v2503
    %v2511 = vadd.f32 %v2479, %v2507
    %v2512 = vadd.f32 %v2480, %v2503
    %v2513 = vadd.f32 %v2481, %v2507
    %v2514 = vadd.f32 %v2482, %v2503
    %v2515 = vadd.f32 %v2483, %v2507
    %v2516 = vadd.f32 %v2484, %v2503
    %v2517 = vadd.f32 %v2485, %v2507
    %v2518 = vadd.f32 %v2486, %v2503
    %v2519 = vadd.f32 %v2487, %v2507
    %v2520 = vadd.f32 %v2488, %v2503
    %v2521 = vadd.f32 %v2489, %v2507
    %v2522 = vadd.f32 %v2490, %v2503
    %v2523 = vadd.f32 %v2491, %v2507
    %v2524 = vadd.f32 %v2492, %v2503
    %v2525 = vadd.f32 %v2493, %v2507
    %v2526 = vadd.f32 %v2494, %v2503
    %v2527 = vadd.f32 %v2495, %v2507
    %v2528 = vadd.f32 %v2496, %v2503
    %v2529 = vadd.f32 %v2497, %v2507
    %v2530 = vmax.f32 %v2510, 0.0
    %v2531 = vmax.f32 %v2511, 0.0
    %v2532 = vmax.f32 %v2512, 0.0
    %v2533 = vmax.f32 %v2513, 0.0
    %v2534 = vmax.f32 %v2514, 0.0
    %v2535 = vmax.f32 %v2515, 0.0
    %v2536 = vmax.f32 %v2516, 0.0
    %v2537 = vmax.f32 %v2517, 0.0
    %v2538 = vmax.f32 %v2518, 0.0
    %v2539 = vmax.f32 %v2519, 0.0
    %v2540 = vmax.f32 %v2520, 0.0
    %v2541 = vmax.f32 %v2521, 0.0
    %v2542 = vmax.f32 %v2522, 0.0
    %v2543 = vmax.f32 %v2523, 0.0
    %v2544 = vmax.f32 %v2524, 0.0
    %v2545 = vmax.f32 %v2525, 0.0
    %v2546 = vmax.f32 %v2526, 0.0
    %v2547 = vmax.f32 %v2527, 0.0
    %v2548 = vmax.f32 %v2528, 0.0
    %v2549 = vmax.f32 %v2529, 0.0
    %v2550 = vmul.f32 %v2530, %v258
    %v2551 = vmul.f32 %v2531, %v258
    %v2552 = vmul.f32 %v2532, %v263
    %v2553 = vmul.f32 %v2533, %v263
    %v2554 = vmul.f32 %v2534, %v268
    %v2555 = vmul.f32 %v2535, %v268
    %v2556 = vmul.f32 %v2536, %v273
    %v2557 = vmul.f32 %v2537, %v273
    %v2558 = vmul.f32 %v2538, %v278
    %v2559 = vmul.f32 %v2539, %v278
    %v2560 = vmul.f32 %v2540, %v283
    %v2561 = vmul.f32 %v2541, %v283
    %v2562 = vmul.f32 %v2542, %v288
    %v2563 = vmul.f32 %v2543, %v288
    %v2564 = vmul.f32 %v2544, %v293
    %v2565 = vmul.f32 %v2545, %v293
    %v2566 = vmul.f32 %v2546, %v298
    %v2567 = vmul.f32 %v2547, %v298
    %v2568 = vmul.f32 %v2548, %v303
    %v2569 = vmul.f32 %v2549, %v303
    %v2570 = vpack.c.bf16 %v2552, %v2550
    %v2571 = vpack.c.bf16 %v2553, %v2551
    %v2572 = vpack.c.bf16 %v2556, %v2554
    %v2573 = vpack.c.bf16 %v2557, %v2555
    %v2574 = vpack.c.bf16 %v2560, %v2558
    %v2575 = vpack.c.bf16 %v2561, %v2559
    %v2576 = vpack.c.bf16 %v2564, %v2562
    %v2577 = vpack.c.bf16 %v2565, %v2563
    %v2578 = vpack.c.bf16 %v2568, %v2566
    %v2579 = vpack.c.bf16 %v2569, %v2567
    %v2590 = vrot.slane %v2570, 4
    %v2591 = vrot.slane %v2571, 4
    %v2592 = vrot.slane %v2572, 4
    %v2593 = vsel %vm325, %v2590, %v2592
    %v2594 = vrot.slane %v2573, 4
    %v2595 = vsel %vm325, %v2591, %v2594
    %v2596 = vrot.slane %v2574, 4
    %v2597 = vsel %vm325, %v2592, %v2596
    %v2598 = vrot.slane %v2575, 4
    %v2599 = vsel %vm325, %v2594, %v2598
    %v2600 = vrot.slane %v2576, 4
    %v2601 = vsel %vm325, %v2596, %v2600
    %v2602 = vrot.slane %v2577, 4
    %v2603 = vsel %vm325, %v2598, %v2602
    %v2604 = vrot.slane %v2578, 4
    %v2605 = vsel %vm325, %v2600, %v2604
    %v2606 = vrot.slane %v2579, 4
    %v2607 = vsel %vm325, %v2602, %v2606
    %2620 = vst [vmem:[#allocation3] sm:$0xf0] %v2590
    %2621 = vst [vmem:[#allocation3 + $0x8] sm:$0xf0] %v2591
    %2622 = vst [vmem:[#allocation3 + $0x10] sm:$0xff] %v2593
    %2623 = vst [vmem:[#allocation3 + $0x18] sm:$0xff] %v2595
    %2624 = vst [vmem:[#allocation3 + $0x20] sm:$0xff] %v2597
    %2625 = vst [vmem:[#allocation3 + $0x28] sm:$0xff] %v2599
    %2626 = vst [vmem:[#allocation3 + $0x30] sm:$0xff] %v2601
    %2627 = vst [vmem:[#allocation3 + $0x38] sm:$0xff] %v2603
    %2628 = vst [vmem:[#allocation3 + $0x40] sm:$0xff] %v2605
    %2629 = vst [vmem:[#allocation3 + $0x48] sm:$0xff] %v2607
    %2630 = vst [vmem:[#allocation3 + $0x50] sm:$0xf] %v2604
    %2631 = vst [vmem:[#allocation3 + $0x58] sm:$0xf] %v2606
    %v2632 = vld [vmem:[#allocation3] sm:$0xff]
    %v2633 = vld [vmem:[#allocation3 + $0x8] sm:$0xff]
    %v2634 = vld [vmem:[#allocation3 + $0x10] sm:$0xff]
    %v2635 = vld [vmem:[#allocation3 + $0x18] sm:$0xff]
    %v2636 = vld [vmem:[#allocation3 + $0x20] sm:$0xff]
    %v2637 = vld [vmem:[#allocation3 + $0x28] sm:$0xff]
    %v2638 = vld [vmem:[#allocation3 + $0x30] sm:$0xff]
    %v2639 = vld [vmem:[#allocation3 + $0x38] sm:$0xff]
    %v2640 = vld [vmem:[#allocation3 + $0x40] sm:$0xff]
    %v2641 = vld [vmem:[#allocation3 + $0x48] sm:$0xff]
    %v2642 = vld [vmem:[#allocation3 + $0x50] sm:$0xff]
    %v2643 = vld [vmem:[#allocation3 + $0x58] sm:$0xff]
    %v2644 = vmax.bf16 %v2632, %v2634
    %v2645 = vmax.bf16 %v2644, %v2636
    %v2646 = vunpack.i.l.bf16 %v2645
    %v2647 = vunpack.i.h.bf16 %v2645
    %v2648 = vmax.f32 %v2646, %v2647
    %v2649 = vrot.slane %v2648, 4
    %v2650 = vmax.f32 %v2648, %v2649
    %v2651 = vrot.slane %v2650, 2
    %v2652 = vmax.f32 %v2650, %v2651
    %v2653 = vrot.slane %v2652, 1
    %v2654 = vmax.f32 %v2652, %v2653
    %v2655 = vpack.i.bf16 %v2654, %v2654
    %v2656 = vmax.bf16 %v2633, %v2635
    %v2657 = vmax.bf16 %v2656, %v2637
    %v2658 = vunpack.i.l.bf16 %v2657
    %v2659 = vunpack.i.h.bf16 %v2657
    %v2660 = vmax.f32 %v2658, %v2659
    %v2661 = vrot.slane %v2660, 4
    %v2662 = vmax.f32 %v2660, %v2661
    %v2663 = vrot.slane %v2662, 2
    %v2664 = vmax.f32 %v2662, %v2663
    %v2665 = vrot.slane %v2664, 1
    %v2666 = vmax.f32 %v2664, %v2665
    %v2667 = vpack.i.bf16 %v2666, %v2666
    %v2668 = vmax.bf16 %v2638, %v2640
    %v2669 = vmax.bf16 %v2668, %v2642
    %v2670 = vunpack.i.l.bf16 %v2669
    %v2671 = vunpack.i.h.bf16 %v2669
    %v2672 = vmax.f32 %v2670, %v2671
    %v2673 = vrot.slane %v2672, 4
    %v2674 = vmax.f32 %v2672, %v2673
    %v2675 = vrot.slane %v2674, 2
    %v2676 = vmax.f32 %v2674, %v2675
    %v2677 = vrot.slane %v2676, 1
    %v2678 = vmax.f32 %v2676, %v2677
    %v2679 = vpack.i.bf16 %v2678, %v2678
    %v2680 = vmax.bf16 %v2639, %v2641
    %v2681 = vmax.bf16 %v2680, %v2643
    %v2682 = vunpack.i.l.bf16 %v2681
    %v2683 = vunpack.i.h.bf16 %v2681
    %v2684 = vmax.f32 %v2682, %v2683
    %v2685 = vrot.slane %v2684, 4
    %v2686 = vmax.f32 %v2684, %v2685
    %v2687 = vrot.slane %v2686, 2
    %v2688 = vmax.f32 %v2686, %v2687
    %v2689 = vrot.slane %v2688, 1
    %v2690 = vmax.f32 %v2688, %v2689
    %v2691 = vpack.i.bf16 %v2690, %v2690
    %v2692 = vld [vmem:[%s9] sm:$0xf]
    %v2693 = vld [vmem:[%s9 + $0x4] sm:$0xf]
    %v2694 = vld [vmem:[%s9 + $0x8] sm:$0xf]
    %v2695 = vld [vmem:[%s9 + $0xc] sm:$0xf]
    %v2696 = vld [vmem:[%s9 + $0x10] sm:$0xf]
    %v2697 = vld [vmem:[%s9 + $0x14] sm:$0xf]
    %v2698 = vld [vmem:[%s9 + $0x18] sm:$0xf]
    %v2699 = vld [vmem:[%s9 + $0x1c] sm:$0xf]
    %v2700 = vld [vmem:[%s9 + $0x20] sm:$0xf]
    %v2701 = vld [vmem:[%s9 + $0x24] sm:$0xf]
    %v2702 = vld [vmem:[%s9 + $0x28] sm:$0xf]
    %v2703 = vld [vmem:[%s9 + $0x2c] sm:$0xf]
    %v2704 = vld [vmem:[%s9 + $0x30] sm:$0xf]
    %v2705 = vld [vmem:[%s9 + $0x34] sm:$0xf]
    %v2706 = vld [vmem:[%s9 + $0x38] sm:$0xf]
    %v2707 = vld [vmem:[%s9 + $0x3c] sm:$0xf]
    %v2708 = vld [vmem:[%s9 + $0x40] sm:$0xf]
    %v2709 = vld [vmem:[%s9 + $0x44] sm:$0xf]
    %v2710 = vld [vmem:[%s9 + $0x48] sm:$0xf]
    %v2711 = vld [vmem:[%s9 + $0x4c] sm:$0xf]
    %v2712 = vld [vmem:[%s9 + $0x50] sm:$0xf]
    %v2713 = vld [vmem:[%s9 + $0x54] sm:$0xf]
    %v2714 = vld [vmem:[%s9 + $0x58] sm:$0xf]
    %v2715 = vld [vmem:[%s9 + $0x5c] sm:$0xf]
    %v2716 = vld [vmem:[%s9 + $0x60] sm:$0xf]
    %v2717 = vld [vmem:[%s9 + $0x64] sm:$0xf]
    %v2718 = vld [vmem:[%s9 + $0x68] sm:$0xf]
    %v2719 = vld [vmem:[%s9 + $0x6c] sm:$0xf]
    %v2720 = vld [vmem:[%s9 + $0x70] sm:$0xf]
    %v2721 = vld [vmem:[%s9 + $0x74] sm:$0xf]
    %v2722 = vld [vmem:[%s9 + $0x78] sm:$0xf]
    %v2723 = vld [vmem:[%s9 + $0x7c] sm:$0xf]
    %v2724 = vld [vmem:[%s10] sm:$0x1]
    %v2726 = vlaneseq
    %v2727 = vshrl.u32 %v2726, 7
    %v2728 = vsub.s32 0, %v2727
    %v2729 = vrot.slane %v2724, %v2728
    %v2735 = vunpack.c.l.b16 %v2655
    %v2736 = vunpack.c.l.b16 %v2667
    %v2737 = vunpack.c.l.b16 %v2679
    %v2738 = vunpack.c.l.b16 %v2691
    %vm2739 = vcmask 1041409
    %v2740 = vsel %vm2739, %v2737, %v2735
    %v2741 = vsel %vm2739, %v2738, %v2736
    %v2742 = vpack.c.b16 %v2740, %v2740
    %v2743 = vpack.c.b16 %v2741, %v2741
    %v2778 = vunpack.c.l.b16 %v2692
    %v2779 = vunpack.c.l.b16 %v2693
    %v2780 = vunpack.c.l.b16 %v2694
    %v2781 = vunpack.c.l.b16 %v2695
    %v2782 = vunpack.c.l.b16 %v2696
    %v2783 = vunpack.c.l.b16 %v2697
    %v2784 = vunpack.c.l.b16 %v2698
    %v2785 = vunpack.c.l.b16 %v2699
    %v2786 = vunpack.c.l.b16 %v2700
    %v2787 = vunpack.c.l.b16 %v2701
    %v2788 = vunpack.c.l.b16 %v2702
    %v2789 = vunpack.c.l.b16 %v2703
    %v2790 = vunpack.c.l.b16 %v2704
    %v2791 = vunpack.c.l.b16 %v2705
    %v2792 = vunpack.c.l.b16 %v2706
    %v2793 = vunpack.c.l.b16 %v2707
    %v2794 = vunpack.c.l.b16 %v2708
    %v2795 = vunpack.c.l.b16 %v2709
    %v2796 = vunpack.c.l.b16 %v2710
    %v2797 = vunpack.c.l.b16 %v2711
    %v2798 = vunpack.c.l.b16 %v2712
    %v2799 = vunpack.c.l.b16 %v2713
    %v2800 = vunpack.c.l.b16 %v2714
    %v2801 = vunpack.c.l.b16 %v2715
    %v2802 = vunpack.c.l.b16 %v2716
    %v2803 = vunpack.c.l.b16 %v2717
    %v2804 = vunpack.c.l.b16 %v2718
    %v2805 = vunpack.c.l.b16 %v2719
    %v2806 = vunpack.c.l.b16 %v2720
    %v2807 = vunpack.c.l.b16 %v2721
    %v2808 = vunpack.c.l.b16 %v2722
    %v2809 = vunpack.c.l.b16 %v2723
    %v2810 = vpack.c.b16 %v2779, %v2778
    %v2811 = vpack.c.b16 %v2781, %v2780
    %v2812 = vpack.c.b16 %v2783, %v2782
    %v2813 = vpack.c.b16 %v2785, %v2784
    %v2814 = vpack.c.b16 %v2787, %v2786
    %v2815 = vpack.c.b16 %v2789, %v2788
    %v2816 = vpack.c.b16 %v2791, %v2790
    %v2817 = vpack.c.b16 %v2793, %v2792
    %v2818 = vpack.c.b16 %v2795, %v2794
    %v2819 = vpack.c.b16 %v2797, %v2796
    %v2820 = vpack.c.b16 %v2799, %v2798
    %v2821 = vpack.c.b16 %v2801, %v2800
    %v2822 = vpack.c.b16 %v2803, %v2802
    %v2823 = vpack.c.b16 %v2805, %v2804
    %v2824 = vpack.c.b16 %v2807, %v2806
    %v2825 = vpack.c.b16 %v2809, %v2808
    %2842 = vmatprep.subr.bf16.mxu0 0
    %2843 = vmatpush1.bf16.msra.mxu0 %v2810
    %2844 = vmatprep.subr.bf16.mxu0 0
    %2845 = vmatpush1.bf16.msra.mxu0 %v2811
    %2846 = vmatprep.subr.bf16.mxu0 0
    %2847 = vmatpush1.bf16.msra.mxu0 %v2812
    %2848 = vmatprep.subr.bf16.mxu0 0
    %2849 = vmatpush1.bf16.msra.mxu0 %v2813
    %2850 = vmatprep.subr.bf16.mxu0 0
    %2851 = vmatpush1.bf16.msra.mxu0 %v2814
    %2852 = vmatprep.subr.bf16.mxu0 0
    %2853 = vmatpush1.bf16.msra.mxu0 %v2815
    %2854 = vmatprep.subr.bf16.mxu0 0
    %2855 = vmatpush1.bf16.msra.mxu0 %v2816
    %2856 = vmatprep.subr.bf16.mxu0 0
    %2857 = vmatpush1.bf16.msra.mxu0 %v2817
    %2858 = vmatprep.subr.bf16.mxu0 0
    %2859 = vmatpush1.bf16.msra.mxu0 %v2818
    %2860 = vmatprep.subr.bf16.mxu0 0
    %2861 = vmatpush1.bf16.msra.mxu0 %v2819
    %2862 = vmatprep.subr.bf16.mxu0 0
    %2863 = vmatpush1.bf16.msra.mxu0 %v2820
    %2864 = vmatprep.subr.bf16.mxu0 0
    %2865 = vmatpush1.bf16.msra.mxu0 %v2821
    %2866 = vmatprep.subr.bf16.mxu0 0
    %2867 = vmatpush1.bf16.msra.mxu0 %v2822
    %2868 = vmatprep.subr.bf16.mxu0 0
    %2869 = vmatpush1.bf16.msra.mxu0 %v2823
    %2870 = vmatprep.subr.bf16.mxu0 0
    %2871 = vmatpush1.bf16.msra.mxu0 %v2824
    %2872 = vmatprep.subr.bf16.mxu0 0
    %2873 = vmatpush1.bf16.msra.mxu0 %v2825
    %2874 = vmatprep.mubr.bf16.mxu0 %v2743
    %2875 = vmatmul.mubr.bf16.gmra.mrb[0].mxu0 %v2742
    %v2876 = vpop.f32.mrb[0].mxu0
    %v2877 = vadd.f32 %v2729, %v2876
    %v2878 = vpop.f32.mrb[0].mxu0
    %v2879 = vpop.f32.mrb[0].mxu0
    %v2880 = vpop.f32.mrb[0].mxu0
    %2881 = vdwg.mxu0
    %vm2882 = vcmask 58368
    %2883 = vst.msk [vmem:[#allocation9] sm:$0x3] %vm2882, %v2877
    // Predicated region
    $region54: #{tpu_custom_call.1} parent=1 // pred_check
      _
    $region55: #{tpu_custom_call.1} parent=1 // pred_check_branch
      %2885 = sbr.rel (0) target = $region57
    $region56: #{tpu_custom_call.1} parent=1 // pred_region
      %s2887 = ssub.s32 32, 32
      %2888 = vsyncadd [#allocation6], %s2887
      %s2890 = sshll.u32 [#allocation9], 4
      %s2891 = int_to_ptr.vmem [resolvable:$true] %s2890
      %2893 = dma.vmem_to_hbm [thread:$0]  %s2891, 32, %s11, [#allocation6]
    $region57: #{tpu_custom_call.1} parent=1 // pred_fallthru
      _
    // Predicated region
    $region58: #{tpu_custom_call.1} parent=1 // pred_check
      _
    $region59: #{tpu_custom_call.1} parent=1 // pred_check_branch
      %2895 = sbr.rel (0) target = $region61
    $region60: #{tpu_custom_call.1} parent=1 // pred_region
      %2896 = dma.done [#allocation6], 32
    $region61: #{tpu_custom_call.1} parent=1 // pred_fallthru
      _
    %2897 = vsyncpa [#allocation5], 1
    %2898 = vsyncpa [#allocation8], 1
    %2899 = vsyncpa [#allocation6], 1

</llo_original>
